<compile_context>
chip_gen: v5e
topology: v5e:2x2
jax: 0.10.0
libtpu: 0.0.40
codegen_flags: <defaults>
</compile_context>

<pallas_src>
import jax
import jax.numpy as jnp
from jax.experimental import pallas as pl
from jax.experimental.pallas import tpu as pltpu


# ---------------------------------------------------------------------------
# Pallas kernel: fused 4-layer GCN + PReLU, tiled over (layer, row-tile, k-tile)
# ---------------------------------------------------------------------------
def encoder_kernel(a_ref, x_ref, w_ref, b_ref, alpha_ref, o_ref,
                   acc_ref, z_ref, h_ref):
    l = pl.program_id(0)            # layer index (outermost, sequential)
    i = pl.program_id(1)            # output row tile
    k = pl.program_id(2)            # A column tile (reduction, innermost)
    nk = pl.num_programs(2)
    last_layer = pl.num_programs(0) - 1

    tm, tk = a_ref.shape
    k0 = pl.multiple_of(k * tk, tk)
    i0 = pl.multiple_of(i * tm, tm)

    # --- Build this layer's right-hand operand Z (row block k), once per layer
    #     (only during the i == 0 sweep).  Layer 1 is reassociated to
    #     (A @ X) @ W1, so its Z is just X.
    @pl.when(jnp.logical_and(i == 0, l == 0))
    def _():
        z_ref[pl.ds(k0, tk), :] = x_ref[pl.ds(k0, tk), :]

    @pl.when(jnp.logical_and(i == 0, l > 0))
    def _():
        z_ref[pl.ds(k0, tk), :] = jnp.dot(
            h_ref[pl.ds(k0, tk), :], w_ref[0],
            preferred_element_type=jnp.float32).astype(z_ref.dtype)

    # --- Zero the f32 accumulator at the start of the k reduction.
    @pl.when(k == 0)
    def _():
        acc_ref[...] = jnp.zeros_like(acc_ref)

    # --- Aggregate on the MXU: acc[i] += A[i, k] @ Z[k]   (bf16 in, f32 acc)
    acc_ref[...] += jnp.dot(a_ref[...], z_ref[pl.ds(k0, tk), :],
                            preferred_element_type=jnp.float32)

    # --- Finalize this row tile at the last k step (bias / W1 post-multiply /
    #     PReLU fused here so they ride the VPU while the MXU keeps streaming).
    is_last_k = k == nk - 1

    @pl.when(jnp.logical_and(is_last_k, l == 0))
    def _():
        # layer 1 reassociation: H1 = (A @ X) @ W1 + b1
        h = jnp.dot(acc_ref[...].astype(jnp.bfloat16), w_ref[0],
                    preferred_element_type=jnp.float32) + b_ref[0]
        h_ref[pl.ds(i0, tm), :] = h.astype(h_ref.dtype)

    @pl.when(jnp.logical_and(is_last_k,
                             jnp.logical_and(l > 0, l != last_layer)))
    def _():
        h = acc_ref[...] + b_ref[0]
        h_ref[pl.ds(i0, tm), :] = h.astype(h_ref.dtype)

    @pl.when(jnp.logical_and(is_last_k, l == last_layer))
    def _():
        h = acc_ref[...] + b_ref[0]
        alpha = alpha_ref[...]                                   # [1, P]
        o_ref[pl.ds(i0, tm), :] = jnp.where(h > 0.0, h, alpha * h).astype(
            o_ref.dtype)


# ---------------------------------------------------------------------------
# Wrapper: padding, BlockSpecs, grid, VMEM budget
# ---------------------------------------------------------------------------
def _round_up(x, m):
    return ((x + m - 1) // m) * m


def encoder_forward(a_hat, x, params, *, tile=128):
    """Fused encoder.  a_hat: [N, N] normalized adjacency, x: [N, C_in]."""
    n, c_in = x.shape
    hidden = params["w1"].shape[1]
    num_layers = 4

    f32, bf16 = jnp.float32, jnp.bfloat16

    # Lane-pad channel dims to a multiple of 128; pad N to a multiple of tile.
    p = _round_up(max(c_in, hidden), 128)
    n_pad = _round_up(n, tile)
    tm = tk = tile

    a_p = jnp.zeros((n_pad, n_pad), bf16).at[:n, :n].set(a_hat.astype(bf16))
    x_p = jnp.zeros((n_pad, p), bf16).at[:n, :c_in].set(x.astype(bf16))

    w_p = jnp.zeros((num_layers, p, p), bf16)
    w_p = w_p.at[0, :c_in, :hidden].set(params["w1"].astype(bf16))
    w_p = w_p.at[1, :hidden, :hidden].set(params["w2"].astype(bf16))
    w_p = w_p.at[2, :hidden, :hidden].set(params["w3"].astype(bf16))
    w_p = w_p.at[3, :hidden, :hidden].set(params["w4"].astype(bf16))

    b_p = jnp.zeros((num_layers, 1, p), f32)
    b_p = b_p.at[0, 0, :hidden].set(params["b1"].reshape(-1))
    b_p = b_p.at[1, 0, :hidden].set(params["b2"].reshape(-1))
    b_p = b_p.at[2, 0, :hidden].set(params["b3"].reshape(-1))
    b_p = b_p.at[3, 0, :hidden].set(params["b4"].reshape(-1))

    alpha_p = jnp.zeros((1, p), f32).at[0, :hidden].set(
        params["alpha"].reshape(-1))

    grid = (num_layers, n_pad // tm, n_pad // tk)

    in_specs = [
        pl.BlockSpec((tm, tk), lambda l, i, k: (i, k)),       # A: streamed tiles
        pl.BlockSpec((n_pad, p), lambda l, i, k: (0, 0)),     # X: VMEM-resident
        pl.BlockSpec((1, p, p), lambda l, i, k: (l, 0, 0)),   # per-layer W
        pl.BlockSpec((1, 1, p), lambda l, i, k: (l, 0, 0)),   # per-layer b
        pl.BlockSpec((1, p), lambda l, i, k: (0, 0)),         # PReLU alpha
    ]
    out_spec = pl.BlockSpec((n_pad, p), lambda l, i, k: (0, 0))  # resident out

    scratch_shapes = [
        pltpu.VMEM((tm, p), f32),       # f32 accumulator for one row tile
        pltpu.VMEM((n_pad, p), bf16),   # Z = H_prev @ W (X for layer 1)
        pltpu.VMEM((n_pad, p), bf16),   # H: current layer's output (resident)
    ]

    # Crude VMEM budget: double-buffered blocked inputs + residents + scratch,
    # with headroom; capped well under v7x's 64 MiB physical VMEM.
    est = (2 * tm * tk * 2          # A tile double buffer (bf16)
           + n_pad * p * 2          # X resident (bf16)
           + 2 * p * p * 2          # W double buffer (bf16)
           + 2 * p * 4 + p * 4      # b double buffer + alpha (f32)
           + n_pad * p * 4          # output resident (f32)
           + tm * p * 4             # accumulator
           + 2 * n_pad * p * 2)     # Z + H scratch (bf16)
    vmem_limit = int(min(max(2 * est + (4 << 20), 16 << 20), 48 << 20))

    out = pl.pallas_call(
        encoder_kernel,
        out_shape=jax.ShapeDtypeStruct((n_pad, p), f32),
        grid_spec=pltpu.PrefetchScalarGridSpec(
            num_scalar_prefetch=0,
            grid=grid,
            in_specs=in_specs,
            out_specs=out_spec,
            scratch_shapes=scratch_shapes,
        ),
        compiler_params=pltpu.CompilerParams(
            # All axes 'arbitrary': the layer axis and the k reduction are
            # sequential, and the row-tile axis carries cross-iteration VMEM
            # state (Z/H scratch) because all four layers are fused in one
            # kernel, so it cannot be sharded across v7x's two TensorCores
            # without splitting layers into separate pallas_calls.
            dimension_semantics=("arbitrary", "arbitrary", "arbitrary"),
            vmem_limit_bytes=vmem_limit,
        ),
    )(a_p, x_p, w_p, b_p, alpha_p)

    return out[:n, :hidden]


# ---------------------------------------------------------------------------
# Plain-JAX glue: GCN-normalized dense adjacency (gcn_norm with self loops)
# ---------------------------------------------------------------------------
def build_gcn_adjacency(edge_index, edge_weight, num_nodes):
    src = edge_index[0]          # message source j
    dst = edge_index[1]          # message target i

    loop_idx = jnp.arange(num_nodes, dtype=src.dtype)
    src = jnp.concatenate([src, loop_idx])
    dst = jnp.concatenate([dst, loop_idx])
    w = jnp.concatenate([edge_weight, jnp.ones((num_nodes,), jnp.float32)])

    deg = jnp.zeros((num_nodes,), jnp.float32).at[dst].add(w)
    deg_inv_sqrt = jnp.where(deg > 0, jax.lax.rsqrt(deg), 0.0)
    norm = deg_inv_sqrt[src] * w * deg_inv_sqrt[dst]

    # out[i] = sum_{(j->i)} norm * x[j]  =>  A_hat[i, j] = norm
    a_hat = jnp.zeros((num_nodes, num_nodes), jnp.float32).at[dst, src].add(norm)
    return a_hat


def init_params(key, in_channels, hidden_channels):
    ks = jax.random.split(key, 4)

    def glorot(k, fan_in, fan_out):
        limit = jnp.sqrt(6.0 / (fan_in + fan_out))
        return jax.random.uniform(k, (fan_in, fan_out), jnp.float32, -limit, limit)

    return {
        "w1": glorot(ks[0], in_channels, hidden_channels),
        "b1": jnp.zeros((hidden_channels,), jnp.float32),
        "w2": glorot(ks[1], hidden_channels, hidden_channels),
        "b2": jnp.zeros((hidden_channels,), jnp.float32),
        "w3": glorot(ks[2], hidden_channels, hidden_channels),
        "b3": jnp.zeros((hidden_channels,), jnp.float32),
        "w4": glorot(ks[3], hidden_channels, hidden_channels),
        "b4": jnp.zeros((hidden_channels,), jnp.float32),
        # nn.PReLU default init = 0.25 per channel
        "alpha": jnp.full((hidden_channels,), 0.25, jnp.float32),
    }


# ---------------------------------------------------------------------------
# Pure-JAX reference mirroring the kernel's mixed precision (for validation)
# ---------------------------------------------------------------------------
def encoder_reference(a_p, x_p, w_p, b_p, alpha_p):
    f32, bf16 = jnp.float32, jnp.bfloat16
    # layer 1 (reassociated): H1 = (A @ X) @ W1 + b1
    ax = jnp.dot(a_p, x_p, preferred_element_type=f32)
    h = jnp.dot(ax.astype(bf16), w_p[0], preferred_element_type=f32) + b_p[0]
    h = h.astype(bf16)
    num_layers = w_p.shape[0]
    for l in range(1, num_layers):
        z = jnp.dot(h, w_p[l], preferred_element_type=f32).astype(bf16)
        h = jnp.dot(a_p, z, preferred_element_type=f32) + b_p[l]
        if l != num_layers - 1:
            h = h.astype(bf16)
    return jnp.where(h > 0.0, h, alpha_p * h)


if __name__ == "__main__":
    key = jax.random.PRNGKey(0)
    k_x, k_e, k_w, k_p = jax.random.split(key, 4)

    num_nodes = 200
    in_channels = 16
    hidden_channels = 32
    num_edges = 600

    # deterministic synthetic graph (data.x, data.edge_index, data.edge_attr)
    x = jax.random.normal(k_x, (num_nodes, in_channels), jnp.float32)
    edge_index = jax.random.randint(k_e, (2, num_edges), 0, num_nodes, jnp.int32)
    edge_weight = jax.random.uniform(k_w, (num_edges,), jnp.float32, 0.1, 1.0)

    params = init_params(k_p, in_channels, hidden_channels)
    a_hat = build_gcn_adjacency(edge_index, edge_weight, num_nodes)

    out = encoder_forward(a_hat, x, params, tile=128)
    out = jax.block_until_ready(out)

    assert out.shape == (num_nodes, hidden_channels), out.shape
    assert out.dtype == jnp.float32
    assert bool(jnp.all(jnp.isfinite(out)))

    # Validate against a pure-JAX reference with matching precision.
    p = _round_up(max(in_channels, hidden_channels), 128)
    n_pad = _round_up(num_nodes, 128)
    bf16, f32 = jnp.bfloat16, jnp.float32
    a_p = jnp.zeros((n_pad, n_pad), bf16).at[:num_nodes, :num_nodes].set(
        a_hat.astype(bf16))
    x_p = jnp.zeros((n_pad, p), bf16).at[:num_nodes, :in_channels].set(
        x.astype(bf16))
    w_p = jnp.zeros((4, p, p), bf16)
    w_p = w_p.at[0, :in_channels, :hidden_channels].set(params["w1"].astype(bf16))
    w_p = w_p.at[1, :hidden_channels, :hidden_channels].set(params["w2"].astype(bf16))
    w_p = w_p.at[2, :hidden_channels, :hidden_channels].set(params["w3"].astype(bf16))
    w_p = w_p.at[3, :hidden_channels, :hidden_channels].set(params["w4"].astype(bf16))
    b_p = jnp.zeros((4, 1, p), f32)
    for li, bn in enumerate(("b1", "b2", "b3", "b4")):
        b_p = b_p.at[li, 0, :hidden_channels].set(params[bn])
    alpha_p = jnp.zeros((1, p), f32).at[0, :hidden_channels].set(params["alpha"])

    ref = encoder_reference(a_p, x_p, w_p, b_p, alpha_p)[:num_nodes,
                                                         :hidden_channels]
    max_err = float(jnp.max(jnp.abs(out - ref)))
    assert max_err < 5e-2, f"max abs error vs reference: {max_err}"

    print("KERNEL_OK")
</pallas_src>

<mosaic_0001>
module attributes {stable_mosaic.version = 11 : i64} {
  func.func @encoder_kernel(%arg0: i32, %arg1: i32, %arg2: i32, %arg3: memref<128x128xbf16, #tpu.memory_space<vmem>>, %arg4: memref<256x128xbf16, #tpu.memory_space<vmem>>, %arg5: memref<1x128x128xbf16, #tpu.memory_space<vmem>>, %arg6: memref<1x1x128xf32, #tpu.memory_space<vmem>>, %arg7: memref<1x128xf32, #tpu.memory_space<vmem>>, %arg8: memref<256x128xf32, #tpu.memory_space<vmem>>, %arg9: memref<128x128xf32, #tpu.memory_space<vmem>>, %arg10: memref<256x128xbf16, #tpu.memory_space<vmem>>, %arg11: memref<256x128xbf16, #tpu.memory_space<vmem>>) attributes {dimension_semantics = [#tpu.dimension_semantics<arbitrary>, #tpu.dimension_semantics<arbitrary>, #tpu.dimension_semantics<arbitrary>], iteration_bounds = array<i64: 4, 2, 2>, scalar_prefetch = 0 : i64, scratch_operands = 3 : i64, tpu.core_type = #tpu.core_type<tc>, window_params = [{transform_indices = @transform_0, window_bounds = array<i64: 128, 128>}, {pipeline_mode = #tpu.pipeline_mode<synchronous>, transform_indices = @transform_1, window_bounds = array<i64: 256, 128>}, {transform_indices = @transform_2, window_bounds = array<i64: 1, 128, 128>}, {transform_indices = @transform_3, window_bounds = array<i64: 1, 1, 128>}, {pipeline_mode = #tpu.pipeline_mode<synchronous>, transform_indices = @transform_4, window_bounds = array<i64: 1, 128>}, {pipeline_mode = #tpu.pipeline_mode<synchronous>, transform_indices = @transform_5, window_bounds = array<i64: 256, 128>}]} {
    %c128_i32 = arith.constant 128 : i32
    %0 = arith.muli %arg2, %c128_i32 : i32
    %1 = tpu.assume_multiple %0, 128 : i32
    %c128_i32_0 = arith.constant 128 : i32
    %2 = arith.muli %arg1, %c128_i32_0 : i32
    %3 = tpu.assume_multiple %2, 128 : i32
    %c0_i32 = arith.constant 0 : i32
    %4 = arith.cmpi eq, %arg1, %c0_i32 : i32
    %c0_i32_1 = arith.constant 0 : i32
    %5 = arith.cmpi eq, %arg0, %c0_i32_1 : i32
    %6 = arith.andi %4, %5 : i1
    %7 = arith.extui %6 : i1 to i32
    %c0_i32_2 = arith.constant 0 : i32
    %8 = arith.cmpi ne, %7, %c0_i32_2 : i32
    scf.if %8 {
      %39 = arith.index_cast %1 : i32 to index
      %c0_20 = arith.constant 0 : index
      %40 = vector.load %arg4[%39, %c0_20] : memref<256x128xbf16, #tpu.memory_space<vmem>>, vector<128x128xbf16>
      %41 = arith.index_cast %1 : i32 to index
      %c0_21 = arith.constant 0 : index
      %42 = vector.load %arg10[%41, %c0_21] : memref<256x128xbf16, #tpu.memory_space<vmem>>, vector<128x128xbf16>
      tpu.vector_store %arg10[%41, %c0_21], %40 {strides = array<i32>} : memref<256x128xbf16, #tpu.memory_space<vmem>>, vector<128x128xbf16>,
    } else {
    }
    %c0_i32_3 = arith.constant 0 : i32
    %9 = arith.cmpi eq, %arg1, %c0_i32_3 : i32
    %c0_i32_4 = arith.constant 0 : i32
    %10 = arith.cmpi sgt, %arg0, %c0_i32_4 : i32
    %11 = arith.andi %9, %10 : i1
    %12 = arith.extui %11 : i1 to i32
    %c0_i32_5 = arith.constant 0 : i32
    %13 = arith.cmpi ne, %12, %c0_i32_5 : i32
    scf.if %13 {
      %39 = arith.index_cast %1 : i32 to index
      %c0_20 = arith.constant 0 : index
      %40 = vector.load %arg11[%39, %c0_20] : memref<256x128xbf16, #tpu.memory_space<vmem>>, vector<128x128xbf16>
      %c0_21 = arith.constant 0 : index
      %c0_22 = arith.constant 0 : index
      %c0_23 = arith.constant 0 : index
      %41 = vector.load %arg5[%c0_21, %c0_22, %c0_23] : memref<1x128x128xbf16, #tpu.memory_space<vmem>>, vector<1x128x128xbf16>
      %42 = vector.shape_cast %41 : vector<1x128x128xbf16> to vector<128x128xbf16>
      %cst_24 = arith.constant dense<0.000000e+00> : vector<128x128xf32>
      %43 = tpu.matmul %40, %42, %cst_24 {dimension_numbers = #tpu.dot_dimension_numbers<[1], [0], [0], [1], [0, 0, 1, 1], [], []>} : vector<128x128xbf16>, vector<128x128xbf16>, vector<128x128xf32> -> vector<128x128xf32>
      %44 = arith.truncf %43 : vector<128x128xf32> to vector<128x128xbf16>
      %45 = arith.index_cast %1 : i32 to index
      %c0_25 = arith.constant 0 : index
      %46 = vector.load %arg10[%45, %c0_25] : memref<256x128xbf16, #tpu.memory_space<vmem>>, vector<128x128xbf16>
      tpu.vector_store %arg10[%45, %c0_25], %44 {strides = array<i32>} : memref<256x128xbf16, #tpu.memory_space<vmem>>, vector<128x128xbf16>,
    } else {
    }
    %c0_i32_6 = arith.constant 0 : i32
    %14 = arith.cmpi eq, %arg2, %c0_i32_6 : i32
    %15 = arith.extui %14 : i1 to i32
    %c0_i32_7 = arith.constant 0 : i32
    %16 = arith.cmpi ne, %15, %c0_i32_7 : i32
    scf.if %16 {
      %cst_20 = arith.constant 0.000000e+00 : f32
      %39 = vector.broadcast %cst_20 : f32 to vector<128x128xf32>
      %c0_21 = arith.constant 0 : index
      %c0_22 = arith.constant 0 : index
      %40 = vector.load %arg9[%c0_21, %c0_22] : memref<128x128xf32, #tpu.memory_space<vmem>>, vector<128x128xf32>
      tpu.vector_store %arg9[%c0_21, %c0_22], %39 {strides = array<i32>} : memref<128x128xf32, #tpu.memory_space<vmem>>, vector<128x128xf32>,
    } else {
    }
    %c0 = arith.constant 0 : index
    %c0_8 = arith.constant 0 : index
    %17 = vector.load %arg9[%c0, %c0_8] : memref<128x128xf32, #tpu.memory_space<vmem>>, vector<128x128xf32>
    %c0_9 = arith.constant 0 : index
    %c0_10 = arith.constant 0 : index
    %18 = vector.load %arg3[%c0_9, %c0_10] : memref<128x128xbf16, #tpu.memory_space<vmem>>, vector<128x128xbf16>
    %19 = arith.index_cast %1 : i32 to index
    %c0_11 = arith.constant 0 : index
    %20 = vector.load %arg10[%19, %c0_11] : memref<256x128xbf16, #tpu.memory_space<vmem>>, vector<128x128xbf16>
    %cst = arith.constant dense<0.000000e+00> : vector<128x128xf32>
    %21 = tpu.matmul %18, %20, %cst {dimension_numbers = #tpu.dot_dimension_numbers<[1], [0], [0], [1], [0, 0, 1, 1], [], []>} : vector<128x128xbf16>, vector<128x128xbf16>, vector<128x128xf32> -> vector<128x128xf32>
    %22 = arith.addf %17, %21 : vector<128x128xf32>
    %c0_12 = arith.constant 0 : index
    %c0_13 = arith.constant 0 : index
    %23 = vector.load %arg9[%c0_12, %c0_13] : memref<128x128xf32, #tpu.memory_space<vmem>>, vector<128x128xf32>
    tpu.vector_store %arg9[%c0_12, %c0_13], %22 {strides = array<i32>} : memref<128x128xf32, #tpu.memory_space<vmem>>, vector<128x128xf32>,
    %c1_i32 = arith.constant 1 : i32
    %24 = arith.cmpi eq, %arg2, %c1_i32 : i32
    %c0_i32_14 = arith.constant 0 : i32
    %25 = arith.cmpi eq, %arg0, %c0_i32_14 : i32
    %26 = arith.andi %24, %25 : i1
    %27 = arith.extui %26 : i1 to i32
    %c0_i32_15 = arith.constant 0 : i32
    %28 = arith.cmpi ne, %27, %c0_i32_15 : i32
    scf.if %28 {
      %c0_20 = arith.constant 0 : index
      %c0_21 = arith.constant 0 : index
      %39 = vector.load %arg9[%c0_20, %c0_21] : memref<128x128xf32, #tpu.memory_space<vmem>>, vector<128x128xf32>
      %40 = arith.truncf %39 : vector<128x128xf32> to vector<128x128xbf16>
      %c0_22 = arith.constant 0 : index
      %c0_23 = arith.constant 0 : index
      %c0_24 = arith.constant 0 : index
      %41 = vector.load %arg5[%c0_22, %c0_23, %c0_24] : memref<1x128x128xbf16, #tpu.memory_space<vmem>>, vector<1x128x128xbf16>
      %42 = vector.shape_cast %41 : vector<1x128x128xbf16> to vector<128x128xbf16>
      %cst_25 = arith.constant dense<0.000000e+00> : vector<128x128xf32>
      %43 = tpu.matmul %40, %42, %cst_25 {dimension_numbers = #tpu.dot_dimension_numbers<[1], [0], [0], [1], [0, 0, 1, 1], [], []>} : vector<128x128xbf16>, vector<128x128xbf16>, vector<128x128xf32> -> vector<128x128xf32>
      %c0_26 = arith.constant 0 : index
      %c0_27 = arith.constant 0 : index
      %c0_28 = arith.constant 0 : index
      %44 = vector.load %arg6[%c0_26, %c0_27, %c0_28] : memref<1x1x128xf32, #tpu.memory_space<vmem>>, vector<1x1x128xf32>
      %45 = vector.shape_cast %44 : vector<1x1x128xf32> to vector<1x128xf32>
      %46 = vector.broadcast %45 : vector<1x128xf32> to vector<128x128xf32>
      %47 = arith.addf %43, %46 : vector<128x128xf32>
      %48 = arith.truncf %47 : vector<128x128xf32> to vector<128x128xbf16>
      %49 = arith.index_cast %3 : i32 to index
      %c0_29 = arith.constant 0 : index
      %50 = vector.load %arg11[%49, %c0_29] : memref<256x128xbf16, #tpu.memory_space<vmem>>, vector<128x128xbf16>
      tpu.vector_store %arg11[%49, %c0_29], %48 {strides = array<i32>} : memref<256x128xbf16, #tpu.memory_space<vmem>>, vector<128x128xbf16>,
    } else {
    }
    %c0_i32_16 = arith.constant 0 : i32
    %29 = arith.cmpi sgt, %arg0, %c0_i32_16 : i32
    %c3_i32 = arith.constant 3 : i32
    %30 = arith.cmpi ne, %arg0, %c3_i32 : i32
    %31 = arith.andi %29, %30 : i1
    %32 = arith.andi %24, %31 : i1
    %33 = arith.extui %32 : i1 to i32
    %c0_i32_17 = arith.constant 0 : i32
    %34 = arith.cmpi ne, %33, %c0_i32_17 : i32
    scf.if %34 {
      %c0_20 = arith.constant 0 : index
      %c0_21 = arith.constant 0 : index
      %39 = vector.load %arg9[%c0_20, %c0_21] : memref<128x128xf32, #tpu.memory_space<vmem>>, vector<128x128xf32>
      %c0_22 = arith.constant 0 : index
      %c0_23 = arith.constant 0 : index
      %c0_24 = arith.constant 0 : index
      %40 = vector.load %arg6[%c0_22, %c0_23, %c0_24] : memref<1x1x128xf32, #tpu.memory_space<vmem>>, vector<1x1x128xf32>
      %41 = vector.shape_cast %40 : vector<1x1x128xf32> to vector<1x128xf32>
      %42 = vector.broadcast %41 : vector<1x128xf32> to vector<128x128xf32>
      %43 = arith.addf %39, %42 : vector<128x128xf32>
      %44 = arith.truncf %43 : vector<128x128xf32> to vector<128x128xbf16>
      %45 = arith.index_cast %3 : i32 to index
      %c0_25 = arith.constant 0 : index
      %46 = vector.load %arg11[%45, %c0_25] : memref<256x128xbf16, #tpu.memory_space<vmem>>, vector<128x128xbf16>
      tpu.vector_store %arg11[%45, %c0_25], %44 {strides = array<i32>} : memref<256x128xbf16, #tpu.memory_space<vmem>>, vector<128x128xbf16>,
    } else {
    }
    %c3_i32_18 = arith.constant 3 : i32
    %35 = arith.cmpi eq, %arg0, %c3_i32_18 : i32
    %36 = arith.andi %24, %35 : i1
    %37 = arith.extui %36 : i1 to i32
    %c0_i32_19 = arith.constant 0 : i32
    %38 = arith.cmpi ne, %37, %c0_i32_19 : i32
    scf.if %38 {
      %c0_20 = arith.constant 0 : index
      %c0_21 = arith.constant 0 : index
      %39 = vector.load %arg9[%c0_20, %c0_21] : memref<128x128xf32, #tpu.memory_space<vmem>>, vector<128x128xf32>
      %c0_22 = arith.constant 0 : index
      %c0_23 = arith.constant 0 : index
      %c0_24 = arith.constant 0 : index
      %40 = vector.load %arg6[%c0_22, %c0_23, %c0_24] : memref<1x1x128xf32, #tpu.memory_space<vmem>>, vector<1x1x128xf32>
      %41 = vector.shape_cast %40 : vector<1x1x128xf32> to vector<1x128xf32>
      %42 = vector.broadcast %41 : vector<1x128xf32> to vector<128x128xf32>
      %43 = arith.addf %39, %42 : vector<128x128xf32>
      %c0_25 = arith.constant 0 : index
      %c0_26 = arith.constant 0 : index
      %44 = vector.load %arg7[%c0_25, %c0_26] : memref<1x128xf32, #tpu.memory_space<vmem>>, vector<1x128xf32>
      %cst_27 = arith.constant 0.000000e+00 : f32
      %45 = vector.broadcast %cst_27 : f32 to vector<128x128xf32>
      %46 = arith.cmpf ogt, %43, %45 : vector<128x128xf32>
      %47 = vector.broadcast %44 : vector<1x128xf32> to vector<128x128xf32>
      %48 = arith.mulf %47, %43 : vector<128x128xf32>
      %49 = arith.select %46, %43, %48 : vector<128x128xi1>, vector<128x128xf32>
      %50 = arith.index_cast %3 : i32 to index
      %c0_28 = arith.constant 0 : index
      %51 = vector.load %arg8[%50, %c0_28] : memref<256x128xf32, #tpu.memory_space<vmem>>, vector<128x128xf32>
      tpu.vector_store %arg8[%50, %c0_28], %49 {strides = array<i32>} : memref<256x128xf32, #tpu.memory_space<vmem>>, vector<128x128xf32>,
    } else {
    }
    return
  }
  func.func @transform_0(%arg0: i32, %arg1: i32, %arg2: i32) -> (i32, i32) {
    %c0_i32 = arith.constant 0 : i32
    return %arg1, %arg2 : i32, i32
  }
  func.func @transform_1(%arg0: i32, %arg1: i32, %arg2: i32) -> (i32, i32) {
    %c0_i32 = arith.constant 0 : i32
    %c0_i32_0 = arith.constant 0 : i32
    %c0_i32_1 = arith.constant 0 : i32
    return %c0_i32, %c0_i32_0 : i32, i32
  }
  func.func @transform_2(%arg0: i32, %arg1: i32, %arg2: i32) -> (i32, i32, i32) {
    %c0_i32 = arith.constant 0 : i32
    %c0_i32_0 = arith.constant 0 : i32
    %c0_i32_1 = arith.constant 0 : i32
    return %arg0, %c0_i32, %c0_i32_0 : i32, i32, i32
  }
  func.func @transform_3(%arg0: i32, %arg1: i32, %arg2: i32) -> (i32, i32, i32) {
    %c0_i32 = arith.constant 0 : i32
    %c0_i32_0 = arith.constant 0 : i32
    %c0_i32_1 = arith.constant 0 : i32
    return %arg0, %c0_i32, %c0_i32_0 : i32, i32, i32
  }
  func.func @transform_4(%arg0: i32, %arg1: i32, %arg2: i32) -> (i32, i32) {
    %c0_i32 = arith.constant 0 : i32
    %c0_i32_0 = arith.constant 0 : i32
    %c0_i32_1 = arith.constant 0 : i32
    return %c0_i32, %c0_i32_0 : i32, i32
  }
  func.func @transform_5(%arg0: i32, %arg1: i32, %arg2: i32) -> (i32, i32) {
    %c0_i32 = arith.constant 0 : i32
    %c0_i32_0 = arith.constant 0 : i32
    %c0_i32_1 = arith.constant 0 : i32
    return %c0_i32, %c0_i32_0 : i32, i32
  }
}

</mosaic_0001>

<llo_original>
// kernel: tpu_custom_call.1
$region0: #{tpu_custom_call.1}
  #allocation0 [shape = 'u32[]', space=smem, size = 0x4, offset = 0x4, fixed_abs, tag = 'smem constant byte address 0x4 - core index']
  #allocation1 [shape = 'u32[72,128]{1,0:T(1,128)}', space=vmem, size = 0x9000, scoped, tag = 'internal scratch']
  #allocation2 [shape = 'f32[128,128]{1,0:T(8,128)}', space=vmem, size = 0x10000, scoped, tag = 'scratch operand']
  #allocation3 [shape = 'bf16[256,128]{1,0:T(8,128)(2,1)}', space=vmem, size = 0x10000, scoped, tag = 'scratch operand']
  #allocation4 [shape = 'bf16[256,128]{1,0:T(8,128)(2,1)}', space=vmem, size = 0x10000, scoped, tag = 'scratch operand']
  %s0 = inlined_call_operand.hbm [shape: bf16[256,256], index: 0, kind: input, shape index: {}]
  %s1 = inlined_call_operand.hbm [shape: bf16[256,128], index: 1, kind: input, shape index: {}]
  %s2 = inlined_call_operand.hbm [shape: bf16[4,128,128], index: 2, kind: input, shape index: {}]
  %s3 = inlined_call_operand.hbm [shape: f32[4,1,128], index: 3, kind: input, shape index: {}]
  %s4 = inlined_call_operand.vmem [shape: f32[1,128], index: 4, kind: input, shape index: {}]
  %s5 = inlined_call_operand.hbm [shape: f32[256,128], index: 5, kind: output, shape index: {}]
  %s6 = sld [smem:[#allocation0]]
  $region93: #{tpu_custom_call.1} parent=0
    _
  %s8 = ssub.s32 1, %s6
  %s9 = scalar_select 0, %s8, %s6
  $region1: #{tpu_custom_call.1} parent=0
    #allocation5 [shape = 'u8[65536]{0}', space=vmem, size = 0x10000, scoped, tag = 'input window, operand 0']
    #allocation6 [shape = 's32[2]{0}', space=sflag, size = 0x8, scoped, tag = 'scoped memory for tpu_custom_call.1']
    #allocation7 [shape = 's32[2]{0}', space=sflag, size = 0x8, scoped, tag = 'scoped memory for tpu_custom_call.1']
    #allocation8 [shape = 'u8[65536]{0}', space=vmem, size = 0x10000, scoped, tag = 'input window, operand 1, single buffered']
    #allocation9 [shape = 's32[1]{0}', space=sflag, size = 0x4, scoped, tag = 'scoped memory for tpu_custom_call.1']
    #allocation10 [shape = 'u8[65536]{0}', space=vmem, size = 0x10000, scoped, tag = 'input window, operand 2']
    #allocation11 [shape = 'u8[1024]{0}', space=vmem, size = 0x400, scoped, tag = 'input window, operand 3']
    #allocation12 [shape = 'u8[131072]{0}', space=vmem, size = 0x20000, scoped, tag = 'output window, operand 0, single buffered']
    %10 = vsyncpa [#allocation6], 0
    %s11 = scalar_lea.sflag [#allocation6], 1
    %12 = vsyncpa %s11, 0
    %13 = vsyncpa [#allocation9], 0
    %14 = vsyncpa [#allocation7], 0
    loop: start=0, step=1, limit=18
    $region2: #{tpu_custom_call.1} parent=1 // loop_pre_header
      _
    $region3: #{tpu_custom_call.1} parent=1 // loop_header
      %s16 = sphi 0, %s20
      %p17 = scmp.ge.s32.totalorder %s16, 18
      %s23 = sphi 0, %s42
      %s24 = sphi 0, %s38
      %s25 = sphi 0, %s34
      %s26 = sphi 0, %s23
      %s27 = sphi 0, %s24
      %s28 = sphi 0, %s25
      %s29 = sphi 0, %s26
      %s30 = sphi 0, %s27
      %s31 = sphi 0, %s28
      %s47 = sphi 0, %s49
      %s50 = sphi 0, %s47
      %s51 = sphi 0, %s50
      %s67 = sphi 0, %s51
      %s71 = sphi 0, %s71
      %s73 = sphi 0, %s71
      %s74 = sphi 0, %s73
      %s88 = sphi 0, %s74
      %s94 = sphi 0, %s96
      %s97 = sphi 0, %s94
      %s98 = sphi 0, %s97
      %s114 = sphi 0, %s98
      %s120 = sphi 0, %s122
      %s123 = sphi 0, %s120
      %s124 = sphi 0, %s123
      %s140 = sphi 0, %s124
      %s144 = sphi 0, %s144
      %s146 = sphi 0, %s144
      %s147 = sphi 0, %s146
      %s161 = sphi 0, %s147
      %s165 = sphi 0, %s165
      %s167 = sphi 0, %s165
      %s168 = sphi 0, %s167
      %s182 = sphi 0, %s168
    $region4: #{tpu_custom_call.1} parent=1 // loop_header_branch
      %19 = sbr.rel (%p17) target = $region8
    $region5: #{tpu_custom_call.1} parent=1 // loop_body
      %s21 = ssub.s32 %s16, 1
      %s22 = ssub.s32 %s16, 2
      %s32 = sadd.s32 1, %s25
      %p33 = scmp.ge.s32.totalorder %s32, 2
      %s34 = scalar_select %p33, 0, %s32
      %s35 = sadd.s32 1, %s24
      %s36 = scalar_select %p33, %s35, %s24
      %p37 = scmp.ge.s32.totalorder %s36, 2
      %s38 = scalar_select %p37, 0, %s36
      %s39 = sadd.s32 1, %s23
      %s40 = scalar_select %p37, %s39, %s23
      %p41 = scmp.ge.s32.totalorder %s40, 4
      %s42 = scalar_select %p41, 0, %s40
      %s43 = ssub.s32 %s24, %s38
      %s44 = ssub.s32 %s25, %s34
      %s45 = sor.u32 %s43, %s44
      %p46 = scmp.eq.s32.totalorder %s45, 0
      %s48 = sadd.s32 %s47, 1
      %s49 = scalar_select %p46, %s47, %s48
      %p52 = pneg %p46
      %p53 = scmp.eq.s32.totalorder %s16, 15
      %p54 = por %p52, %p53
      %p55 = scmp.ne.s32.totalorder %s47, %s50
      %p56 = scmp.eq.s32.totalorder %s16, 0
      %p57 = por %p55, %p56
      %p58 = scmp.ne.s32.totalorder %s47, %s50
      %p59 = scmp.eq.s32.totalorder %s21, 15
      %p60 = por %p58, %p59
      %p61 = scmp.ne.s32.totalorder %s50, %s51
      %p62 = scmp.eq.s32.totalorder %s21, 0
      %p63 = por %p61, %p62
      %p64 = scmp.ne.s32.totalorder %s50, %s51
      %p65 = scmp.eq.s32.totalorder %s22, 15
      %p66 = por %p64, %p65
      %p68 = scmp.ne.s32.totalorder %s51, %s67
      %p69 = scmp.eq.s32.totalorder %s22, 0
      %p70 = por %p68, %p69
      %s72 = sadd.s32 %s71, 1
      %p75 = scmp.eq.s32.totalorder %s16, 15
      %p76 = scmp.ne.s32.totalorder %s71, %s73
      %p77 = scmp.eq.s32.totalorder %s16, 0
      %p78 = por %p76, %p77
      %p79 = scmp.ne.s32.totalorder %s71, %s73
      %p80 = scmp.eq.s32.totalorder %s21, 15
      %p81 = por %p79, %p80
      %p82 = scmp.ne.s32.totalorder %s73, %s74
      %p83 = scmp.eq.s32.totalorder %s21, 0
      %p84 = por %p82, %p83
      %p85 = scmp.ne.s32.totalorder %s73, %s74
      %p86 = scmp.eq.s32.totalorder %s22, 15
      %p87 = por %p85, %p86
      %p89 = scmp.ne.s32.totalorder %s74, %s88
      %p90 = scmp.eq.s32.totalorder %s22, 0
      %p91 = por %p89, %p90
      %s92 = ssub.s32 %s23, %s42
      %p93 = scmp.eq.s32.totalorder %s92, 0
      %s95 = sadd.s32 %s94, 1
      %s96 = scalar_select %p93, %s94, %s95
      %p99 = pneg %p93
      %p100 = scmp.eq.s32.totalorder %s16, 15
      %p101 = por %p99, %p100
      %p102 = scmp.ne.s32.totalorder %s94, %s97
      %p103 = scmp.eq.s32.totalorder %s16, 0
      %p104 = por %p102, %p103
      %p105 = scmp.ne.s32.totalorder %s94, %s97
      %p106 = scmp.eq.s32.totalorder %s21, 15
      %p107 = por %p105, %p106
      %p108 = scmp.ne.s32.totalorder %s97, %s98
      %p109 = scmp.eq.s32.totalorder %s21, 0
      %p110 = por %p108, %p109
      %p111 = scmp.ne.s32.totalorder %s97, %s98
      %p112 = scmp.eq.s32.totalorder %s22, 15
      %p113 = por %p111, %p112
      %p115 = scmp.ne.s32.totalorder %s98, %s114
      %p116 = scmp.eq.s32.totalorder %s22, 0
      %p117 = por %p115, %p116
      %s118 = ssub.s32 %s23, %s42
      %p119 = scmp.eq.s32.totalorder %s118, 0
      %s121 = sadd.s32 %s120, 1
      %s122 = scalar_select %p119, %s120, %s121
      %p125 = pneg %p119
      %p126 = scmp.eq.s32.totalorder %s16, 15
      %p127 = por %p125, %p126
      %p128 = scmp.ne.s32.totalorder %s120, %s123
      %p129 = scmp.eq.s32.totalorder %s16, 0
      %p130 = por %p128, %p129
      %p131 = scmp.ne.s32.totalorder %s120, %s123
      %p132 = scmp.eq.s32.totalorder %s21, 15
      %p133 = por %p131, %p132
      %p134 = scmp.ne.s32.totalorder %s123, %s124
      %p135 = scmp.eq.s32.totalorder %s21, 0
      %p136 = por %p134, %p135
      %p137 = scmp.ne.s32.totalorder %s123, %s124
      %p138 = scmp.eq.s32.totalorder %s22, 15
      %p139 = por %p137, %p138
      %p141 = scmp.ne.s32.totalorder %s124, %s140
      %p142 = scmp.eq.s32.totalorder %s22, 0
      %p143 = por %p141, %p142
      %s145 = sadd.s32 %s144, 1
      %p148 = scmp.eq.s32.totalorder %s16, 15
      %p149 = scmp.ne.s32.totalorder %s144, %s146
      %p150 = scmp.eq.s32.totalorder %s16, 0
      %p151 = por %p149, %p150
      %p152 = scmp.ne.s32.totalorder %s144, %s146
      %p153 = scmp.eq.s32.totalorder %s21, 15
      %p154 = por %p152, %p153
      %p155 = scmp.ne.s32.totalorder %s146, %s147
      %p156 = scmp.eq.s32.totalorder %s21, 0
      %p157 = por %p155, %p156
      %p158 = scmp.ne.s32.totalorder %s146, %s147
      %p159 = scmp.eq.s32.totalorder %s22, 15
      %p160 = por %p158, %p159
      %p162 = scmp.ne.s32.totalorder %s147, %s161
      %p163 = scmp.eq.s32.totalorder %s22, 0
      %p164 = por %p162, %p163
      %s166 = sadd.s32 %s165, 1
      %p169 = scmp.eq.s32.totalorder %s16, 15
      %p170 = scmp.ne.s32.totalorder %s165, %s167
      %p171 = scmp.eq.s32.totalorder %s16, 0
      %p172 = por %p170, %p171
      %p173 = scmp.ne.s32.totalorder %s165, %s167
      %p174 = scmp.eq.s32.totalorder %s21, 15
      %p175 = por %p173, %p174
      %p176 = scmp.ne.s32.totalorder %s167, %s168
      %p177 = scmp.eq.s32.totalorder %s21, 0
      %p178 = por %p176, %p177
      %p179 = scmp.ne.s32.totalorder %s167, %s168
      %p180 = scmp.eq.s32.totalorder %s22, 15
      %p181 = por %p179, %p180
      %p183 = scmp.ne.s32.totalorder %s168, %s182
      %p184 = scmp.eq.s32.totalorder %s22, 0
      %p185 = por %p183, %p184
      %p186 = scmp.le.s32.totalorder 1, %s16
      %p187 = scmp.lt.s32.totalorder %s16, 17
      %p188 = pnand %p186, %p187
      %p189 = pneg %p188
      // Predicated region
      $region9: #{tpu_custom_call.1} parent=5 // pred_check
        _
      $region10: #{tpu_custom_call.1} parent=5 // pred_check_branch
        %191 = sbr.rel (%p188) target = $region12
      $region11: #{tpu_custom_call.1} parent=5 // pred_region
        %s192 = ssub.s32 %s16, 1
        // Predicated region
        $region13: #{tpu_custom_call.1} parent=11 // pred_check
          %p193 = pneg %p84
        $region14: #{tpu_custom_call.1} parent=11 // pred_check_branch
          %195 = sbr.rel (%p193) target = $region16
        $region15: #{tpu_custom_call.1} parent=11 // pred_region
          %197 = vsyncadd [#allocation9], 0
          %s198 = sshll.u32 %s1, 4
          %s199 = int_to_ptr.hbm [resolvable:$true] %s198
          %s200 = sshll.u32 [#allocation8], 4
          %s201 = int_to_ptr.vmem [resolvable:$true] %s200
          %206 = dma.hbm_to_vmem [thread:$0]  %s199, 2048, %s201, [#allocation9], 64, 64, 4
        $region16: #{tpu_custom_call.1} parent=11 // pred_fallthru
          _
        // Predicated region
        $region17: #{tpu_custom_call.1} parent=11 // pred_check
          %p207 = pneg %p157
        $region18: #{tpu_custom_call.1} parent=11 // pred_check_branch
          %209 = sbr.rel (%p207) target = $region20
        $region19: #{tpu_custom_call.1} parent=11 // pred_region
          _
        $region20: #{tpu_custom_call.1} parent=11 // pred_fallthru
          _
      $region12: #{tpu_custom_call.1} parent=5 // pred_fallthru
        _
      %p210 = scmp.lt.s32.totalorder %s16, 16
      // Predicated region
      $region21: #{tpu_custom_call.1} parent=5 // pred_check
        %p211 = pneg %p210
      $region22: #{tpu_custom_call.1} parent=5 // pred_check_branch
        %213 = sbr.rel (%p211) target = $region24
      $region23: #{tpu_custom_call.1} parent=5 // pred_region
        // Predicated region
        $region25: #{tpu_custom_call.1} parent=23 // pred_check
          %p214 = pneg %p57
        $region26: #{tpu_custom_call.1} parent=23 // pred_check_branch
          %216 = sbr.rel (%p214) target = $region28
        $region27: #{tpu_custom_call.1} parent=23 // pred_region
          %s217 = sand.u32 %s16, 1
          %s218 = scalar_lea.sflag [#allocation6], %s217
          %s219 = sand.u32 %s47, 1
          %s220 = smul.addr %s219, 64
          %s221 = scalar_lea.vmem [#allocation5], %s220
          %s222 = smul.u32 16, %s24
          %224 = vsyncadd %s218, 0
          %s225 = smul.addr %s222, 2
          %s226 = sadd.s32 %s25, %s225
          %s227 = smul.addr %s226, 4
          %s228 = scalar_lea.hbm %s0, %s227
          %s229 = sshll.u32 %s228, 4
          %s230 = int_to_ptr.hbm [resolvable:$true] %s229
          %s231 = sshll.u32 %s221, 4
          %s232 = int_to_ptr.vmem [resolvable:$true] %s231
          %237 = dma.hbm_to_vmem [thread:$0]  %s230, 1024, %s232, %s218, 128, 64, 4
        $region28: #{tpu_custom_call.1} parent=23 // pred_fallthru
          _
        // Predicated region
        $region29: #{tpu_custom_call.1} parent=23 // pred_check
          %p238 = pneg %p104
        $region30: #{tpu_custom_call.1} parent=23 // pred_check_branch
          %240 = sbr.rel (%p238) target = $region32
        $region31: #{tpu_custom_call.1} parent=23 // pred_region
          %s241 = sand.u32 %s16, 1
          %s242 = scalar_lea.sflag [#allocation6], %s241
          %s243 = sand.u32 %s94, 1
          %s244 = smul.addr %s243, 64
          %s245 = scalar_lea.vmem [#allocation10], %s244
          %247 = vsyncadd %s242, 0
          %s248 = smul.addr %s23, 16
          %s249 = smul.addr %s248, 4
          %s250 = scalar_lea.hbm %s2, %s249
          %s251 = sshll.u32 %s250, 4
          %s252 = int_to_ptr.hbm [resolvable:$true] %s251
          %s253 = sshll.u32 %s245, 4
          %s254 = int_to_ptr.vmem [resolvable:$true] %s253
          %259 = dma.hbm_to_vmem [thread:$0]  %s252, 1024, %s254, %s242, 64, 64, 4
        $region32: #{tpu_custom_call.1} parent=23 // pred_fallthru
          _
        // Predicated region
        $region33: #{tpu_custom_call.1} parent=23 // pred_check
          %p260 = pneg %p130
        $region34: #{tpu_custom_call.1} parent=23 // pred_check_branch
          %262 = sbr.rel (%p260) target = $region36
        $region35: #{tpu_custom_call.1} parent=23 // pred_region
          %s263 = sand.u32 %s16, 1
          %s264 = scalar_lea.sflag [#allocation6], %s263
          %s265 = sand.u32 %s120, 1
          %s266 = scalar_lea.vmem [#allocation11], %s265
          %268 = vsyncadd %s264, 0
          %s269 = scalar_lea.hbm %s3, %s23
          %s271 = sshll.u32 %s269, 4
          %s272 = int_to_ptr.hbm [resolvable:$true] %s271
          %s273 = sshll.u32 %s266, 4
          %s274 = int_to_ptr.vmem [resolvable:$true] %s273
          %276 = dma.hbm_to_vmem [thread:$0]  %s272, 16, %s274, %s264
        $region36: #{tpu_custom_call.1} parent=23 // pred_fallthru
          _
      $region24: #{tpu_custom_call.1} parent=5 // pred_fallthru
        _
      %p277 = scmp.le.s32.totalorder 1, %s16
      %p278 = scmp.lt.s32.totalorder %s16, 17
      %p279 = pnand %p277, %p278
      %p280 = pneg %p279
      // Predicated region
      $region37: #{tpu_custom_call.1} parent=5 // pred_check
        _
      $region38: #{tpu_custom_call.1} parent=5 // pred_check_branch
        %282 = sbr.rel (%p279) target = $region40
      $region39: #{tpu_custom_call.1} parent=5 // pred_region
        %s283 = ssub.s32 %s16, 1
        %s284 = sand.u32 %s21, 1
        %s285 = scalar_lea.sflag [#allocation6], %s284
        %s286 = sand.u32 %s50, 1
        %s287 = smul.addr %s286, 64
        %s288 = scalar_lea.vmem [#allocation5], %s287
        // Predicated region
        $region41: #{tpu_custom_call.1} parent=39 // pred_check
          %p289 = pneg %p63
        $region42: #{tpu_custom_call.1} parent=39 // pred_check_branch
          %291 = sbr.rel (%p289) target = $region44
        $region43: #{tpu_custom_call.1} parent=39 // pred_region
          %293 = dma.done %s285, 1024
        $region44: #{tpu_custom_call.1} parent=39 // pred_fallthru
          _
        // Predicated region
        $region45: #{tpu_custom_call.1} parent=39 // pred_check
          %p294 = pneg %p84
        $region46: #{tpu_custom_call.1} parent=39 // pred_check_branch
          %296 = sbr.rel (%p294) target = $region48
        $region47: #{tpu_custom_call.1} parent=39 // pred_region
          %298 = dma.done [#allocation9], 2048
        $region48: #{tpu_custom_call.1} parent=39 // pred_fallthru
          _
        %s299 = sand.u32 %s21, 1
        %s300 = scalar_lea.sflag [#allocation6], %s299
        %s301 = sand.u32 %s97, 1
        %s302 = smul.addr %s301, 64
        %s303 = scalar_lea.vmem [#allocation10], %s302
        // Predicated region
        $region49: #{tpu_custom_call.1} parent=39 // pred_check
          %p304 = pneg %p110
        $region50: #{tpu_custom_call.1} parent=39 // pred_check_branch
          %306 = sbr.rel (%p304) target = $region52
        $region51: #{tpu_custom_call.1} parent=39 // pred_region
          %308 = dma.done %s300, 1024
        $region52: #{tpu_custom_call.1} parent=39 // pred_fallthru
          _
        %s309 = sand.u32 %s21, 1
        %s310 = scalar_lea.sflag [#allocation6], %s309
        %s311 = sand.u32 %s123, 1
        %s312 = scalar_lea.vmem [#allocation11], %s311
        // Predicated region
        $region53: #{tpu_custom_call.1} parent=39 // pred_check
          %p313 = pneg %p136
        $region54: #{tpu_custom_call.1} parent=39 // pred_check_branch
          %315 = sbr.rel (%p313) target = $region56
        $region55: #{tpu_custom_call.1} parent=39 // pred_region
          %317 = dma.done %s310, 16
        $region56: #{tpu_custom_call.1} parent=39 // pred_fallthru
          _
        %s318 = sand.u32 %s21, 1
        %s319 = scalar_lea.sflag [#allocation6], %s318
        %s320 = sand.u32 %s50, 1
        %s321 = smul.addr %s320, 64
        %s322 = scalar_lea.vmem [#allocation5], %s321
        %p323 = pneg %p63
        %p324 = pneg %p60
        %p325 = pneg %p84
        %p326 = pneg %p81
        %s327 = sand.u32 %s21, 1
        %s328 = scalar_lea.sflag [#allocation6], %s327
        %s329 = sand.u32 %s97, 1
        %s330 = smul.addr %s329, 64
        %s331 = scalar_lea.vmem [#allocation10], %s330
        %p332 = pneg %p110
        %p333 = pneg %p107
        %s334 = sand.u32 %s21, 1
        %s335 = scalar_lea.sflag [#allocation6], %s334
        %s336 = sand.u32 %s123, 1
        %s337 = scalar_lea.vmem [#allocation11], %s336
        %p338 = pneg %p136
        %p339 = pneg %p133
        %p340 = pneg %p157
        %p341 = pneg %p154
        %p342 = pneg %p178
        %p343 = pneg %p175
        %s344 = smul.u32 16, %s27
        %s345 = smul.u32 %s28, 128
        %s346 = smul.u32 %s27, 128
        %p347 = scmp.eq.s32.totalorder %s27, 0
        %p348 = scmp.eq.s32.totalorder %s26, 0
        %p349 = pnand %p347, %p348
        %p350 = pneg %p349
        // Predicated region
        $region57: #{tpu_custom_call.1} parent=39 // pred_check
          _
        $region58: #{tpu_custom_call.1} parent=39 // pred_check_branch
          %352 = sbr.rel (%p349) target = $region60
        $region59: #{tpu_custom_call.1} parent=39 // pred_region
          %s353 = sshra.s32 %s345, 3
          %s354 = sand.u32 %s345, 7
          %s355 = smul.addr %s353, 4
          %s356 = scalar_lea.vmem [#allocation8], %s355
          %v357 = vld [vmem:[%s356] sm:$0xf]
          %v358 = vld [vmem:[%s356 + $0x4] sm:$0xf]
          %v359 = vld [vmem:[%s356 + $0x8] sm:$0xf]
          %v360 = vld [vmem:[%s356 + $0xc] sm:$0xf]
          %v361 = vld [vmem:[%s356 + $0x10] sm:$0xf]
          %v362 = vld [vmem:[%s356 + $0x14] sm:$0xf]
          %v363 = vld [vmem:[%s356 + $0x18] sm:$0xf]
          %v364 = vld [vmem:[%s356 + $0x1c] sm:$0xf]
          %v365 = vld [vmem:[%s356 + $0x20] sm:$0xf]
          %v366 = vld [vmem:[%s356 + $0x24] sm:$0xf]
          %v367 = vld [vmem:[%s356 + $0x28] sm:$0xf]
          %v368 = vld [vmem:[%s356 + $0x2c] sm:$0xf]
          %v369 = vld [vmem:[%s356 + $0x30] sm:$0xf]
          %v370 = vld [vmem:[%s356 + $0x34] sm:$0xf]
          %v371 = vld [vmem:[%s356 + $0x38] sm:$0xf]
          %v372 = vld [vmem:[%s356 + $0x3c] sm:$0xf]
          %s373 = smul.addr %s353, 4
          %s374 = scalar_lea.vmem [#allocation3], %s373
          %375 = vst [vmem:[%s374] sm:$0xf] %v357
          %376 = vst [vmem:[%s374 + $0x4] sm:$0xf] %v358
          %377 = vst [vmem:[%s374 + $0x8] sm:$0xf] %v359
          %378 = vst [vmem:[%s374 + $0xc] sm:$0xf] %v360
          %379 = vst [vmem:[%s374 + $0x10] sm:$0xf] %v361
          %380 = vst [vmem:[%s374 + $0x14] sm:$0xf] %v362
          %381 = vst [vmem:[%s374 + $0x18] sm:$0xf] %v363
          %382 = vst [vmem:[%s374 + $0x1c] sm:$0xf] %v364
          %383 = vst [vmem:[%s374 + $0x20] sm:$0xf] %v365
          %384 = vst [vmem:[%s374 + $0x24] sm:$0xf] %v366
          %385 = vst [vmem:[%s374 + $0x28] sm:$0xf] %v367
          %386 = vst [vmem:[%s374 + $0x2c] sm:$0xf] %v368
          %387 = vst [vmem:[%s374 + $0x30] sm:$0xf] %v369
          %388 = vst [vmem:[%s374 + $0x34] sm:$0xf] %v370
          %389 = vst [vmem:[%s374 + $0x38] sm:$0xf] %v371
          %390 = vst [vmem:[%s374 + $0x3c] sm:$0xf] %v372
        $region60: #{tpu_custom_call.1} parent=39 // pred_fallthru
          _
        %p391 = scmp.gt.s32.totalorder %s26, 0
        %p392 = pnand %p347, %p391
        %p393 = pneg %p392
        // Predicated region
        $region61: #{tpu_custom_call.1} parent=39 // pred_check
          _
        $region62: #{tpu_custom_call.1} parent=39 // pred_check_branch
          %395 = sbr.rel (%p392) target = $region64
        $region63: #{tpu_custom_call.1} parent=39 // pred_region
          %s396 = sshra.s32 %s345, 3
          %s397 = sand.u32 %s345, 7
          %s398 = smul.addr %s396, 4
          %s399 = scalar_lea.vmem [#allocation4], %s398
          %v400 = vld [vmem:[%s399] sm:$0xf]
          %v401 = vld [vmem:[%s399 + $0x4] sm:$0xf]
          %v402 = vld [vmem:[%s399 + $0x8] sm:$0xf]
          %v403 = vld [vmem:[%s399 + $0xc] sm:$0xf]
          %v404 = vld [vmem:[%s399 + $0x10] sm:$0xf]
          %v405 = vld [vmem:[%s399 + $0x14] sm:$0xf]
          %v406 = vld [vmem:[%s399 + $0x18] sm:$0xf]
          %v407 = vld [vmem:[%s399 + $0x1c] sm:$0xf]
          %v408 = vld [vmem:[%s399 + $0x20] sm:$0xf]
          %v409 = vld [vmem:[%s399 + $0x24] sm:$0xf]
          %v410 = vld [vmem:[%s399 + $0x28] sm:$0xf]
          %v411 = vld [vmem:[%s399 + $0x2c] sm:$0xf]
          %v412 = vld [vmem:[%s399 + $0x30] sm:$0xf]
          %v413 = vld [vmem:[%s399 + $0x34] sm:$0xf]
          %v414 = vld [vmem:[%s399 + $0x38] sm:$0xf]
          %v415 = vld [vmem:[%s399 + $0x3c] sm:$0xf]
          %v416 = vld [vmem:[%s303] sm:$0xf]
          %v417 = vld [vmem:[%s303 + $0x4] sm:$0xf]
          %v418 = vld [vmem:[%s303 + $0x8] sm:$0xf]
          %v419 = vld [vmem:[%s303 + $0xc] sm:$0xf]
          %v420 = vld [vmem:[%s303 + $0x10] sm:$0xf]
          %v421 = vld [vmem:[%s303 + $0x14] sm:$0xf]
          %v422 = vld [vmem:[%s303 + $0x18] sm:$0xf]
          %v423 = vld [vmem:[%s303 + $0x1c] sm:$0xf]
          %v424 = vld [vmem:[%s303 + $0x20] sm:$0xf]
          %v425 = vld [vmem:[%s303 + $0x24] sm:$0xf]
          %v426 = vld [vmem:[%s303 + $0x28] sm:$0xf]
          %v427 = vld [vmem:[%s303 + $0x2c] sm:$0xf]
          %v428 = vld [vmem:[%s303 + $0x30] sm:$0xf]
          %v429 = vld [vmem:[%s303 + $0x34] sm:$0xf]
          %v430 = vld [vmem:[%s303 + $0x38] sm:$0xf]
          %v431 = vld [vmem:[%s303 + $0x3c] sm:$0xf]
          %v448 = vunpack.c.l.b16 %v400
          %v449 = vunpack.c.l.b16 %v401
          %v450 = vunpack.c.l.b16 %v402
          %v451 = vunpack.c.l.b16 %v403
          %v452 = vunpack.c.l.b16 %v404
          %v453 = vunpack.c.l.b16 %v405
          %v454 = vunpack.c.l.b16 %v406
          %v455 = vunpack.c.l.b16 %v407
          %v456 = vunpack.c.l.b16 %v408
          %v457 = vunpack.c.l.b16 %v409
          %v458 = vunpack.c.l.b16 %v410
          %v459 = vunpack.c.l.b16 %v411
          %v460 = vunpack.c.l.b16 %v412
          %v461 = vunpack.c.l.b16 %v413
          %v462 = vunpack.c.l.b16 %v414
          %v463 = vunpack.c.l.b16 %v415
          %v464 = vpack.c.b16 %v449, %v448
          %v465 = vpack.c.b16 %v451, %v450
          %v466 = vpack.c.b16 %v453, %v452
          %v467 = vpack.c.b16 %v455, %v454
          %v468 = vpack.c.b16 %v457, %v456
          %v469 = vpack.c.b16 %v459, %v458
          %v470 = vpack.c.b16 %v461, %v460
          %v471 = vpack.c.b16 %v463, %v462
          %v496 = vunpack.c.l.b16 %v416
          %v497 = vunpack.c.l.b16 %v417
          %v498 = vunpack.c.l.b16 %v418
          %v499 = vunpack.c.l.b16 %v419
          %v500 = vunpack.c.l.b16 %v420
          %v501 = vunpack.c.l.b16 %v421
          %v502 = vunpack.c.l.b16 %v422
          %v503 = vunpack.c.l.b16 %v423
          %v504 = vunpack.c.l.b16 %v424
          %v505 = vunpack.c.l.b16 %v425
          %v506 = vunpack.c.l.b16 %v426
          %v507 = vunpack.c.l.b16 %v427
          %v508 = vunpack.c.l.b16 %v428
          %v509 = vunpack.c.l.b16 %v429
          %v510 = vunpack.c.l.b16 %v430
          %v511 = vunpack.c.l.b16 %v431
          %v512 = vpack.c.b16 %v497, %v496
          %v513 = vpack.c.b16 %v499, %v498
          %v514 = vpack.c.b16 %v501, %v500
          %v515 = vpack.c.b16 %v503, %v502
          %v516 = vpack.c.b16 %v505, %v504
          %v517 = vpack.c.b16 %v507, %v506
          %v518 = vpack.c.b16 %v509, %v508
          %v519 = vpack.c.b16 %v511, %v510
          %528 = vmatpush.bf16.msra.mxu0 %v519
          %529 = vmatpush.bf16.msra.mxu0 %v518
          %530 = vmatpush.bf16.msra.mxu0 %v517
          %531 = vmatpush.bf16.msra.mxu0 %v516
          %532 = vmatpush.bf16.msra.mxu0 %v515
          %533 = vmatpush.bf16.msra.mxu0 %v514
          %534 = vmatpush.bf16.msra.mxu0 %v513
          %535 = vmatpush.bf16.msra.mxu0 %v512
          %536 = vmatmul.bf16.gmra.mxu0 %v464
          %v537 = vpop.f32.mrf.mxu0
          %v538 = vadd.f32 0.0, %v537
          %v539 = vpop.f32.mrf.mxu0
          %v540 = vadd.f32 0.0, %v539
          %541 = vmatmul.bf16.gmra.mxu0 %v465
          %v542 = vpop.f32.mrf.mxu0
          %v543 = vadd.f32 0.0, %v542
          %v544 = vpop.f32.mrf.mxu0
          %v545 = vadd.f32 0.0, %v544
          %546 = vmatmul.bf16.gmra.mxu0 %v466
          %v547 = vpop.f32.mrf.mxu0
          %v548 = vadd.f32 0.0, %v547
          %v549 = vpop.f32.mrf.mxu0
          %v550 = vadd.f32 0.0, %v549
          %551 = vmatmul.bf16.gmra.mxu0 %v467
          %v552 = vpop.f32.mrf.mxu0
          %v553 = vadd.f32 0.0, %v552
          %v554 = vpop.f32.mrf.mxu0
          %v555 = vadd.f32 0.0, %v554
          %556 = vmatmul.bf16.gmra.mxu0 %v468
          %v557 = vpop.f32.mrf.mxu0
          %v558 = vadd.f32 0.0, %v557
          %v559 = vpop.f32.mrf.mxu0
          %v560 = vadd.f32 0.0, %v559
          %561 = vmatmul.bf16.gmra.mxu0 %v469
          %v562 = vpop.f32.mrf.mxu0
          %v563 = vadd.f32 0.0, %v562
          %v564 = vpop.f32.mrf.mxu0
          %v565 = vadd.f32 0.0, %v564
          %566 = vmatmul.bf16.gmra.mxu0 %v470
          %v567 = vpop.f32.mrf.mxu0
          %v568 = vadd.f32 0.0, %v567
          %v569 = vpop.f32.mrf.mxu0
          %v570 = vadd.f32 0.0, %v569
          %571 = vmatmul.bf16.gmra.mxu0 %v471
          %v572 = vpop.f32.mrf.mxu0
          %v573 = vadd.f32 0.0, %v572
          %v574 = vpop.f32.mrf.mxu0
          %v575 = vadd.f32 0.0, %v574
          %576 = vdwg.mxu0
          %v577 = vpack.c.bf16 %v538, %v538
          %v578 = vpack.c.bf16 %v540, %v540
          %v579 = vpack.c.bf16 %v543, %v543
          %v580 = vpack.c.bf16 %v545, %v545
          %v581 = vpack.c.bf16 %v548, %v548
          %v582 = vpack.c.bf16 %v550, %v550
          %v583 = vpack.c.bf16 %v553, %v553
          %v584 = vpack.c.bf16 %v555, %v555
          %v585 = vpack.c.bf16 %v558, %v558
          %v586 = vpack.c.bf16 %v560, %v560
          %v587 = vpack.c.bf16 %v563, %v563
          %v588 = vpack.c.bf16 %v565, %v565
          %v589 = vpack.c.bf16 %v568, %v568
          %v590 = vpack.c.bf16 %v570, %v570
          %v591 = vpack.c.bf16 %v573, %v573
          %v592 = vpack.c.bf16 %v575, %v575
          %s593 = smul.addr %s396, 4
          %s594 = scalar_lea.vmem [#allocation3], %s593
          %595 = vst [vmem:[%s594] sm:$0xf] %v577
          %596 = vst [vmem:[%s594 + $0x4] sm:$0xf] %v578
          %597 = vst [vmem:[%s594 + $0x8] sm:$0xf] %v579
          %598 = vst [vmem:[%s594 + $0xc] sm:$0xf] %v580
          %599 = vst [vmem:[%s594 + $0x10] sm:$0xf] %v581
          %600 = vst [vmem:[%s594 + $0x14] sm:$0xf] %v582
          %601 = vst [vmem:[%s594 + $0x18] sm:$0xf] %v583
          %602 = vst [vmem:[%s594 + $0x1c] sm:$0xf] %v584
          %603 = vst [vmem:[%s594 + $0x20] sm:$0xf] %v585
          %604 = vst [vmem:[%s594 + $0x24] sm:$0xf] %v586
          %605 = vst [vmem:[%s594 + $0x28] sm:$0xf] %v587
          %606 = vst [vmem:[%s594 + $0x2c] sm:$0xf] %v588
          %607 = vst [vmem:[%s594 + $0x30] sm:$0xf] %v589
          %608 = vst [vmem:[%s594 + $0x34] sm:$0xf] %v590
          %609 = vst [vmem:[%s594 + $0x38] sm:$0xf] %v591
          %610 = vst [vmem:[%s594 + $0x3c] sm:$0xf] %v592
        $region64: #{tpu_custom_call.1} parent=39 // pred_fallthru
          _
        %p611 = scmp.eq.s32.totalorder %s28, 0
        // Predicated region
        $region65: #{tpu_custom_call.1} parent=39 // pred_check
          %p612 = pneg %p611
        $region66: #{tpu_custom_call.1} parent=39 // pred_check_branch
          %614 = sbr.rel (%p612) target = $region68
        $region67: #{tpu_custom_call.1} parent=39 // pred_region
          %615 = vst [vmem:[#allocation2] sm:$0xff] 0.0
          %616 = vst [vmem:[#allocation2 + $0x8] sm:$0xff] 0.0
          %617 = vst [vmem:[#allocation2 + $0x10] sm:$0xff] 0.0
          %618 = vst [vmem:[#allocation2 + $0x18] sm:$0xff] 0.0
          %619 = vst [vmem:[#allocation2 + $0x20] sm:$0xff] 0.0
          %620 = vst [vmem:[#allocation2 + $0x28] sm:$0xff] 0.0
          %621 = vst [vmem:[#allocation2 + $0x30] sm:$0xff] 0.0
          %622 = vst [vmem:[#allocation2 + $0x38] sm:$0xff] 0.0
          %623 = vst [vmem:[#allocation2 + $0x40] sm:$0xff] 0.0
          %624 = vst [vmem:[#allocation2 + $0x48] sm:$0xff] 0.0
          %625 = vst [vmem:[#allocation2 + $0x50] sm:$0xff] 0.0
          %626 = vst [vmem:[#allocation2 + $0x58] sm:$0xff] 0.0
          %627 = vst [vmem:[#allocation2 + $0x60] sm:$0xff] 0.0
          %628 = vst [vmem:[#allocation2 + $0x68] sm:$0xff] 0.0
          %629 = vst [vmem:[#allocation2 + $0x70] sm:$0xff] 0.0
          %630 = vst [vmem:[#allocation2 + $0x78] sm:$0xff] 0.0
        $region68: #{tpu_custom_call.1} parent=39 // pred_fallthru
          _
        %v631 = vld [vmem:[#allocation2] sm:$0xff]
        %v632 = vld [vmem:[#allocation2 + $0x8] sm:$0xff]
        %v633 = vld [vmem:[#allocation2 + $0x10] sm:$0xff]
        %v634 = vld [vmem:[#allocation2 + $0x18] sm:$0xff]
        %v635 = vld [vmem:[#allocation2 + $0x20] sm:$0xff]
        %v636 = vld [vmem:[#allocation2 + $0x28] sm:$0xff]
        %v637 = vld [vmem:[#allocation2 + $0x30] sm:$0xff]
        %v638 = vld [vmem:[#allocation2 + $0x38] sm:$0xff]
        %v639 = vld [vmem:[#allocation2 + $0x40] sm:$0xff]
        %v640 = vld [vmem:[#allocation2 + $0x48] sm:$0xff]
        %v641 = vld [vmem:[#allocation2 + $0x50] sm:$0xff]
        %v642 = vld [vmem:[#allocation2 + $0x58] sm:$0xff]
        %v643 = vld [vmem:[#allocation2 + $0x60] sm:$0xff]
        %v644 = vld [vmem:[#allocation2 + $0x68] sm:$0xff]
        %v645 = vld [vmem:[#allocation2 + $0x70] sm:$0xff]
        %v646 = vld [vmem:[#allocation2 + $0x78] sm:$0xff]
        %v647 = vld [vmem:[%s288] sm:$0xf]
        %v648 = vld [vmem:[%s288 + $0x4] sm:$0xf]
        %v649 = vld [vmem:[%s288 + $0x8] sm:$0xf]
        %v650 = vld [vmem:[%s288 + $0xc] sm:$0xf]
        %v651 = vld [vmem:[%s288 + $0x10] sm:$0xf]
        %v652 = vld [vmem:[%s288 + $0x14] sm:$0xf]
        %v653 = vld [vmem:[%s288 + $0x18] sm:$0xf]
        %v654 = vld [vmem:[%s288 + $0x1c] sm:$0xf]
        %v655 = vld [vmem:[%s288 + $0x20] sm:$0xf]
        %v656 = vld [vmem:[%s288 + $0x24] sm:$0xf]
        %v657 = vld [vmem:[%s288 + $0x28] sm:$0xf]
        %v658 = vld [vmem:[%s288 + $0x2c] sm:$0xf]
        %v659 = vld [vmem:[%s288 + $0x30] sm:$0xf]
        %v660 = vld [vmem:[%s288 + $0x34] sm:$0xf]
        %v661 = vld [vmem:[%s288 + $0x38] sm:$0xf]
        %v662 = vld [vmem:[%s288 + $0x3c] sm:$0xf]
        %s663 = sshra.s32 %s345, 3
        %s664 = sand.u32 %s345, 7
        %s665 = smul.addr %s663, 4
        %s666 = scalar_lea.vmem [#allocation3], %s665
        %v667 = vld [vmem:[%s666] sm:$0xf]
        %v668 = vld [vmem:[%s666 + $0x4] sm:$0xf]
        %v669 = vld [vmem:[%s666 + $0x8] sm:$0xf]
        %v670 = vld [vmem:[%s666 + $0xc] sm:$0xf]
        %v671 = vld [vmem:[%s666 + $0x10] sm:$0xf]
        %v672 = vld [vmem:[%s666 + $0x14] sm:$0xf]
        %v673 = vld [vmem:[%s666 + $0x18] sm:$0xf]
        %v674 = vld [vmem:[%s666 + $0x1c] sm:$0xf]
        %v675 = vld [vmem:[%s666 + $0x20] sm:$0xf]
        %v676 = vld [vmem:[%s666 + $0x24] sm:$0xf]
        %v677 = vld [vmem:[%s666 + $0x28] sm:$0xf]
        %v678 = vld [vmem:[%s666 + $0x2c] sm:$0xf]
        %v679 = vld [vmem:[%s666 + $0x30] sm:$0xf]
        %v680 = vld [vmem:[%s666 + $0x34] sm:$0xf]
        %v681 = vld [vmem:[%s666 + $0x38] sm:$0xf]
        %v682 = vld [vmem:[%s666 + $0x3c] sm:$0xf]
        %v699 = vunpack.c.l.b16 %v647
        %v700 = vunpack.c.l.b16 %v648
        %v701 = vunpack.c.l.b16 %v649
        %v702 = vunpack.c.l.b16 %v650
        %v703 = vunpack.c.l.b16 %v651
        %v704 = vunpack.c.l.b16 %v652
        %v705 = vunpack.c.l.b16 %v653
        %v706 = vunpack.c.l.b16 %v654
        %v707 = vunpack.c.l.b16 %v655
        %v708 = vunpack.c.l.b16 %v656
        %v709 = vunpack.c.l.b16 %v657
        %v710 = vunpack.c.l.b16 %v658
        %v711 = vunpack.c.l.b16 %v659
        %v712 = vunpack.c.l.b16 %v660
        %v713 = vunpack.c.l.b16 %v661
        %v714 = vunpack.c.l.b16 %v662
        %v715 = vpack.c.b16 %v700, %v699
        %v716 = vpack.c.b16 %v702, %v701
        %v717 = vpack.c.b16 %v704, %v703
        %v718 = vpack.c.b16 %v706, %v705
        %v719 = vpack.c.b16 %v708, %v707
        %v720 = vpack.c.b16 %v710, %v709
        %v721 = vpack.c.b16 %v712, %v711
        %v722 = vpack.c.b16 %v714, %v713
        %v747 = vunpack.c.l.b16 %v667
        %v748 = vunpack.c.l.b16 %v668
        %v749 = vunpack.c.l.b16 %v669
        %v750 = vunpack.c.l.b16 %v670
        %v751 = vunpack.c.l.b16 %v671
        %v752 = vunpack.c.l.b16 %v672
        %v753 = vunpack.c.l.b16 %v673
        %v754 = vunpack.c.l.b16 %v674
        %v755 = vunpack.c.l.b16 %v675
        %v756 = vunpack.c.l.b16 %v676
        %v757 = vunpack.c.l.b16 %v677
        %v758 = vunpack.c.l.b16 %v678
        %v759 = vunpack.c.l.b16 %v679
        %v760 = vunpack.c.l.b16 %v680
        %v761 = vunpack.c.l.b16 %v681
        %v762 = vunpack.c.l.b16 %v682
        %v763 = vpack.c.b16 %v748, %v747
        %v764 = vpack.c.b16 %v750, %v749
        %v765 = vpack.c.b16 %v752, %v751
        %v766 = vpack.c.b16 %v754, %v753
        %v767 = vpack.c.b16 %v756, %v755
        %v768 = vpack.c.b16 %v758, %v757
        %v769 = vpack.c.b16 %v760, %v759
        %v770 = vpack.c.b16 %v762, %v761
        %779 = vmatpush.bf16.msra.mxu0 %v770
        %780 = vmatpush.bf16.msra.mxu0 %v769
        %781 = vmatpush.bf16.msra.mxu0 %v768
        %782 = vmatpush.bf16.msra.mxu0 %v767
        %783 = vmatpush.bf16.msra.mxu0 %v766
        %784 = vmatpush.bf16.msra.mxu0 %v765
        %785 = vmatpush.bf16.msra.mxu0 %v764
        %786 = vmatpush.bf16.msra.mxu0 %v763
        %787 = vmatmul.bf16.gmra.mxu0 %v715
        %v788 = vpop.f32.mrf.mxu0
        %v789 = vadd.f32 0.0, %v788
        %v790 = vpop.f32.mrf.mxu0
        %v791 = vadd.f32 0.0, %v790
        %792 = vmatmul.bf16.gmra.mxu0 %v716
        %v793 = vpop.f32.mrf.mxu0
        %v794 = vadd.f32 0.0, %v793
        %v795 = vpop.f32.mrf.mxu0
        %v796 = vadd.f32 0.0, %v795
        %797 = vmatmul.bf16.gmra.mxu0 %v717
        %v798 = vpop.f32.mrf.mxu0
        %v799 = vadd.f32 0.0, %v798
        %v800 = vpop.f32.mrf.mxu0
        %v801 = vadd.f32 0.0, %v800
        %802 = vmatmul.bf16.gmra.mxu0 %v718
        %v803 = vpop.f32.mrf.mxu0
        %v804 = vadd.f32 0.0, %v803
        %v805 = vpop.f32.mrf.mxu0
        %v806 = vadd.f32 0.0, %v805
        %807 = vmatmul.bf16.gmra.mxu0 %v719
        %v808 = vpop.f32.mrf.mxu0
        %v809 = vadd.f32 0.0, %v808
        %v810 = vpop.f32.mrf.mxu0
        %v811 = vadd.f32 0.0, %v810
        %812 = vmatmul.bf16.gmra.mxu0 %v720
        %v813 = vpop.f32.mrf.mxu0
        %v814 = vadd.f32 0.0, %v813
        %v815 = vpop.f32.mrf.mxu0
        %v816 = vadd.f32 0.0, %v815
        %817 = vmatmul.bf16.gmra.mxu0 %v721
        %v818 = vpop.f32.mrf.mxu0
        %v819 = vadd.f32 0.0, %v818
        %v820 = vpop.f32.mrf.mxu0
        %v821 = vadd.f32 0.0, %v820
        %822 = vmatmul.bf16.gmra.mxu0 %v722
        %v823 = vpop.f32.mrf.mxu0
        %v824 = vadd.f32 0.0, %v823
        %v825 = vpop.f32.mrf.mxu0
        %v826 = vadd.f32 0.0, %v825
        %827 = vdwg.mxu0
        %v828 = vadd.f32 %v631, %v789
        %v829 = vadd.f32 %v632, %v791
        %v830 = vadd.f32 %v633, %v794
        %v831 = vadd.f32 %v634, %v796
        %v832 = vadd.f32 %v635, %v799
        %v833 = vadd.f32 %v636, %v801
        %v834 = vadd.f32 %v637, %v804
        %v835 = vadd.f32 %v638, %v806
        %v836 = vadd.f32 %v639, %v809
        %v837 = vadd.f32 %v640, %v811
        %v838 = vadd.f32 %v641, %v814
        %v839 = vadd.f32 %v642, %v816
        %v840 = vadd.f32 %v643, %v819
        %v841 = vadd.f32 %v644, %v821
        %v842 = vadd.f32 %v645, %v824
        %v843 = vadd.f32 %v646, %v826
        %844 = vst [vmem:[#allocation2] sm:$0xff] %v828
        %845 = vst [vmem:[#allocation2 + $0x8] sm:$0xff] %v829
        %846 = vst [vmem:[#allocation2 + $0x10] sm:$0xff] %v830
        %847 = vst [vmem:[#allocation2 + $0x18] sm:$0xff] %v831
        %848 = vst [vmem:[#allocation2 + $0x20] sm:$0xff] %v832
        %849 = vst [vmem:[#allocation2 + $0x28] sm:$0xff] %v833
        %850 = vst [vmem:[#allocation2 + $0x30] sm:$0xff] %v834
        %851 = vst [vmem:[#allocation2 + $0x38] sm:$0xff] %v835
        %852 = vst [vmem:[#allocation2 + $0x40] sm:$0xff] %v836
        %853 = vst [vmem:[#allocation2 + $0x48] sm:$0xff] %v837
        %854 = vst [vmem:[#allocation2 + $0x50] sm:$0xff] %v838
        %855 = vst [vmem:[#allocation2 + $0x58] sm:$0xff] %v839
        %856 = vst [vmem:[#allocation2 + $0x60] sm:$0xff] %v840
        %857 = vst [vmem:[#allocation2 + $0x68] sm:$0xff] %v841
        %858 = vst [vmem:[#allocation2 + $0x70] sm:$0xff] %v842
        %859 = vst [vmem:[#allocation2 + $0x78] sm:$0xff] %v843
        %p860 = scmp.eq.s32.totalorder %s28, 1
        %p861 = pnand %p860, %p348
        %p862 = pneg %p861
        // Predicated region
        $region69: #{tpu_custom_call.1} parent=39 // pred_check
          _
        $region70: #{tpu_custom_call.1} parent=39 // pred_check_branch
          %864 = sbr.rel (%p861) target = $region72
        $region71: #{tpu_custom_call.1} parent=39 // pred_region
          %v865 = vld [vmem:[#allocation2] sm:$0xff]
          %v866 = vld [vmem:[#allocation2 + $0x8] sm:$0xff]
          %v867 = vld [vmem:[#allocation2 + $0x10] sm:$0xff]
          %v868 = vld [vmem:[#allocation2 + $0x18] sm:$0xff]
          %v869 = vld [vmem:[#allocation2 + $0x20] sm:$0xff]
          %v870 = vld [vmem:[#allocation2 + $0x28] sm:$0xff]
          %v871 = vld [vmem:[#allocation2 + $0x30] sm:$0xff]
          %v872 = vld [vmem:[#allocation2 + $0x38] sm:$0xff]
          %v873 = vld [vmem:[#allocation2 + $0x40] sm:$0xff]
          %v874 = vld [vmem:[#allocation2 + $0x48] sm:$0xff]
          %v875 = vld [vmem:[#allocation2 + $0x50] sm:$0xff]
          %v876 = vld [vmem:[#allocation2 + $0x58] sm:$0xff]
          %v877 = vld [vmem:[#allocation2 + $0x60] sm:$0xff]
          %v878 = vld [vmem:[#allocation2 + $0x68] sm:$0xff]
          %v879 = vld [vmem:[#allocation2 + $0x70] sm:$0xff]
          %v880 = vld [vmem:[#allocation2 + $0x78] sm:$0xff]
          %v881 = vpack.c.bf16 %v866, %v865
          %v882 = vpack.c.bf16 %v868, %v867
          %v883 = vpack.c.bf16 %v870, %v869
          %v884 = vpack.c.bf16 %v872, %v871
          %v885 = vpack.c.bf16 %v874, %v873
          %v886 = vpack.c.bf16 %v876, %v875
          %v887 = vpack.c.bf16 %v878, %v877
          %v888 = vpack.c.bf16 %v880, %v879
          %v889 = vld [vmem:[%s303] sm:$0xf]
          %v890 = vld [vmem:[%s303 + $0x4] sm:$0xf]
          %v891 = vld [vmem:[%s303 + $0x8] sm:$0xf]
          %v892 = vld [vmem:[%s303 + $0xc] sm:$0xf]
          %v893 = vld [vmem:[%s303 + $0x10] sm:$0xf]
          %v894 = vld [vmem:[%s303 + $0x14] sm:$0xf]
          %v895 = vld [vmem:[%s303 + $0x18] sm:$0xf]
          %v896 = vld [vmem:[%s303 + $0x1c] sm:$0xf]
          %v897 = vld [vmem:[%s303 + $0x20] sm:$0xf]
          %v898 = vld [vmem:[%s303 + $0x24] sm:$0xf]
          %v899 = vld [vmem:[%s303 + $0x28] sm:$0xf]
          %v900 = vld [vmem:[%s303 + $0x2c] sm:$0xf]
          %v901 = vld [vmem:[%s303 + $0x30] sm:$0xf]
          %v902 = vld [vmem:[%s303 + $0x34] sm:$0xf]
          %v903 = vld [vmem:[%s303 + $0x38] sm:$0xf]
          %v904 = vld [vmem:[%s303 + $0x3c] sm:$0xf]
          %v905 = vld [vmem:[%s312] sm:$0x1]
          %v907 = vperm.slane %v905, 0
          %v925 = vunpack.c.l.b16 %v889
          %v926 = vunpack.c.l.b16 %v890
          %v927 = vunpack.c.l.b16 %v891
          %v928 = vunpack.c.l.b16 %v892
          %v929 = vunpack.c.l.b16 %v893
          %v930 = vunpack.c.l.b16 %v894
          %v931 = vunpack.c.l.b16 %v895
          %v932 = vunpack.c.l.b16 %v896
          %v933 = vunpack.c.l.b16 %v897
          %v934 = vunpack.c.l.b16 %v898
          %v935 = vunpack.c.l.b16 %v899
          %v936 = vunpack.c.l.b16 %v900
          %v937 = vunpack.c.l.b16 %v901
          %v938 = vunpack.c.l.b16 %v902
          %v939 = vunpack.c.l.b16 %v903
          %v940 = vunpack.c.l.b16 %v904
          %v941 = vpack.c.b16 %v926, %v925
          %v942 = vpack.c.b16 %v928, %v927
          %v943 = vpack.c.b16 %v930, %v929
          %v944 = vpack.c.b16 %v932, %v931
          %v945 = vpack.c.b16 %v934, %v933
          %v946 = vpack.c.b16 %v936, %v935
          %v947 = vpack.c.b16 %v938, %v937
          %v948 = vpack.c.b16 %v940, %v939
          %957 = vmatpush.bf16.msra.mxu0 %v948
          %958 = vmatpush.bf16.msra.mxu0 %v947
          %959 = vmatpush.bf16.msra.mxu0 %v946
          %960 = vmatpush.bf16.msra.mxu0 %v945
          %961 = vmatpush.bf16.msra.mxu0 %v944
          %962 = vmatpush.bf16.msra.mxu0 %v943
          %963 = vmatpush.bf16.msra.mxu0 %v942
          %964 = vmatpush.bf16.msra.mxu0 %v941
          %965 = vmatmul.bf16.gmra.mxu0 %v881
          %v966 = vpop.f32.mrf.mxu0
          %v967 = vadd.f32 %v907, %v966
          %v968 = vpop.f32.mrf.mxu0
          %v969 = vadd.f32 %v907, %v968
          %970 = vmatmul.bf16.gmra.mxu0 %v882
          %v971 = vpop.f32.mrf.mxu0
          %v972 = vadd.f32 %v907, %v971
          %v973 = vpop.f32.mrf.mxu0
          %v974 = vadd.f32 %v907, %v973
          %975 = vmatmul.bf16.gmra.mxu0 %v883
          %v976 = vpop.f32.mrf.mxu0
          %v977 = vadd.f32 %v907, %v976
          %v978 = vpop.f32.mrf.mxu0
          %v979 = vadd.f32 %v907, %v978
          %980 = vmatmul.bf16.gmra.mxu0 %v884
          %v981 = vpop.f32.mrf.mxu0
          %v982 = vadd.f32 %v907, %v981
          %v983 = vpop.f32.mrf.mxu0
          %v984 = vadd.f32 %v907, %v983
          %985 = vmatmul.bf16.gmra.mxu0 %v885
          %v986 = vpop.f32.mrf.mxu0
          %v987 = vadd.f32 %v907, %v986
          %v988 = vpop.f32.mrf.mxu0
          %v989 = vadd.f32 %v907, %v988
          %990 = vmatmul.bf16.gmra.mxu0 %v886
          %v991 = vpop.f32.mrf.mxu0
          %v992 = vadd.f32 %v907, %v991
          %v993 = vpop.f32.mrf.mxu0
          %v994 = vadd.f32 %v907, %v993
          %995 = vmatmul.bf16.gmra.mxu0 %v887
          %v996 = vpop.f32.mrf.mxu0
          %v997 = vadd.f32 %v907, %v996
          %v998 = vpop.f32.mrf.mxu0
          %v999 = vadd.f32 %v907, %v998
          %1000 = vmatmul.bf16.gmra.mxu0 %v888
          %v1001 = vpop.f32.mrf.mxu0
          %v1002 = vadd.f32 %v907, %v1001
          %v1003 = vpop.f32.mrf.mxu0
          %v1004 = vadd.f32 %v907, %v1003
          %1005 = vdwg.mxu0
          %v1006 = vpack.c.bf16 %v967, %v967
          %v1007 = vpack.c.bf16 %v969, %v969
          %v1008 = vpack.c.bf16 %v972, %v972
          %v1009 = vpack.c.bf16 %v974, %v974
          %v1010 = vpack.c.bf16 %v977, %v977
          %v1011 = vpack.c.bf16 %v979, %v979
          %v1012 = vpack.c.bf16 %v982, %v982
          %v1013 = vpack.c.bf16 %v984, %v984
          %v1014 = vpack.c.bf16 %v987, %v987
          %v1015 = vpack.c.bf16 %v989, %v989
          %v1016 = vpack.c.bf16 %v992, %v992
          %v1017 = vpack.c.bf16 %v994, %v994
          %v1018 = vpack.c.bf16 %v997, %v997
          %v1019 = vpack.c.bf16 %v999, %v999
          %v1020 = vpack.c.bf16 %v1002, %v1002
          %v1021 = vpack.c.bf16 %v1004, %v1004
          %s1022 = sshra.s32 %s346, 3
          %s1023 = sand.u32 %s346, 7
          %s1024 = smul.addr %s1022, 4
          %s1025 = scalar_lea.vmem [#allocation4], %s1024
          %1026 = vst [vmem:[%s1025] sm:$0xf] %v1006
          %1027 = vst [vmem:[%s1025 + $0x4] sm:$0xf] %v1007
          %1028 = vst [vmem:[%s1025 + $0x8] sm:$0xf] %v1008
          %1029 = vst [vmem:[%s1025 + $0xc] sm:$0xf] %v1009
          %1030 = vst [vmem:[%s1025 + $0x10] sm:$0xf] %v1010
          %1031 = vst [vmem:[%s1025 + $0x14] sm:$0xf] %v1011
          %1032 = vst [vmem:[%s1025 + $0x18] sm:$0xf] %v1012
          %1033 = vst [vmem:[%s1025 + $0x1c] sm:$0xf] %v1013
          %1034 = vst [vmem:[%s1025 + $0x20] sm:$0xf] %v1014
          %1035 = vst [vmem:[%s1025 + $0x24] sm:$0xf] %v1015
          %1036 = vst [vmem:[%s1025 + $0x28] sm:$0xf] %v1016
          %1037 = vst [vmem:[%s1025 + $0x2c] sm:$0xf] %v1017
          %1038 = vst [vmem:[%s1025 + $0x30] sm:$0xf] %v1018
          %1039 = vst [vmem:[%s1025 + $0x34] sm:$0xf] %v1019
          %1040 = vst [vmem:[%s1025 + $0x38] sm:$0xf] %v1020
          %1041 = vst [vmem:[%s1025 + $0x3c] sm:$0xf] %v1021
        $region72: #{tpu_custom_call.1} parent=39 // pred_fallthru
          _
        %p1042 = scmp.ne.s32.totalorder %s26, 3
        %p1043 = pnand %p391, %p1042
        %p1044 = pneg %p1043
        %p1045 = pnand %p860, %p1044
        %p1046 = pneg %p1045
        // Predicated region
        $region73: #{tpu_custom_call.1} parent=39 // pred_check
          _
        $region74: #{tpu_custom_call.1} parent=39 // pred_check_branch
          %1048 = sbr.rel (%p1045) target = $region76
        $region75: #{tpu_custom_call.1} parent=39 // pred_region
          %v1049 = vld [vmem:[#allocation2] sm:$0xff]
          %v1050 = vld [vmem:[#allocation2 + $0x8] sm:$0xff]
          %v1051 = vld [vmem:[#allocation2 + $0x10] sm:$0xff]
          %v1052 = vld [vmem:[#allocation2 + $0x18] sm:$0xff]
          %v1053 = vld [vmem:[#allocation2 + $0x20] sm:$0xff]
          %v1054 = vld [vmem:[#allocation2 + $0x28] sm:$0xff]
          %v1055 = vld [vmem:[#allocation2 + $0x30] sm:$0xff]
          %v1056 = vld [vmem:[#allocation2 + $0x38] sm:$0xff]
          %v1057 = vld [vmem:[#allocation2 + $0x40] sm:$0xff]
          %v1058 = vld [vmem:[#allocation2 + $0x48] sm:$0xff]
          %v1059 = vld [vmem:[#allocation2 + $0x50] sm:$0xff]
          %v1060 = vld [vmem:[#allocation2 + $0x58] sm:$0xff]
          %v1061 = vld [vmem:[#allocation2 + $0x60] sm:$0xff]
          %v1062 = vld [vmem:[#allocation2 + $0x68] sm:$0xff]
          %v1063 = vld [vmem:[#allocation2 + $0x70] sm:$0xff]
          %v1064 = vld [vmem:[#allocation2 + $0x78] sm:$0xff]
          %v1065 = vld [vmem:[%s312] sm:$0x1]
          %v1067 = vperm.slane %v1065, 0
          %v1069 = vadd.f32 %v1049, %v1067
          %v1070 = vadd.f32 %v1050, %v1067
          %v1071 = vadd.f32 %v1051, %v1067
          %v1072 = vadd.f32 %v1052, %v1067
          %v1073 = vadd.f32 %v1053, %v1067
          %v1074 = vadd.f32 %v1054, %v1067
          %v1075 = vadd.f32 %v1055, %v1067
          %v1076 = vadd.f32 %v1056, %v1067
          %v1077 = vadd.f32 %v1057, %v1067
          %v1078 = vadd.f32 %v1058, %v1067
          %v1079 = vadd.f32 %v1059, %v1067
          %v1080 = vadd.f32 %v1060, %v1067
          %v1081 = vadd.f32 %v1061, %v1067
          %v1082 = vadd.f32 %v1062, %v1067
          %v1083 = vadd.f32 %v1063, %v1067
          %v1084 = vadd.f32 %v1064, %v1067
          %v1085 = vpack.c.bf16 %v1069, %v1069
          %v1086 = vpack.c.bf16 %v1070, %v1070
          %v1087 = vpack.c.bf16 %v1071, %v1071
          %v1088 = vpack.c.bf16 %v1072, %v1072
          %v1089 = vpack.c.bf16 %v1073, %v1073
          %v1090 = vpack.c.bf16 %v1074, %v1074
          %v1091 = vpack.c.bf16 %v1075, %v1075
          %v1092 = vpack.c.bf16 %v1076, %v1076
          %v1093 = vpack.c.bf16 %v1077, %v1077
          %v1094 = vpack.c.bf16 %v1078, %v1078
          %v1095 = vpack.c.bf16 %v1079, %v1079
          %v1096 = vpack.c.bf16 %v1080, %v1080
          %v1097 = vpack.c.bf16 %v1081, %v1081
          %v1098 = vpack.c.bf16 %v1082, %v1082
          %v1099 = vpack.c.bf16 %v1083, %v1083
          %v1100 = vpack.c.bf16 %v1084, %v1084
          %s1101 = sshra.s32 %s346, 3
          %s1102 = sand.u32 %s346, 7
          %s1103 = smul.addr %s1101, 4
          %s1104 = scalar_lea.vmem [#allocation4], %s1103
          %1105 = vst [vmem:[%s1104] sm:$0xf] %v1085
          %1106 = vst [vmem:[%s1104 + $0x4] sm:$0xf] %v1086
          %1107 = vst [vmem:[%s1104 + $0x8] sm:$0xf] %v1087
          %1108 = vst [vmem:[%s1104 + $0xc] sm:$0xf] %v1088
          %1109 = vst [vmem:[%s1104 + $0x10] sm:$0xf] %v1089
          %1110 = vst [vmem:[%s1104 + $0x14] sm:$0xf] %v1090
          %1111 = vst [vmem:[%s1104 + $0x18] sm:$0xf] %v1091
          %1112 = vst [vmem:[%s1104 + $0x1c] sm:$0xf] %v1092
          %1113 = vst [vmem:[%s1104 + $0x20] sm:$0xf] %v1093
          %1114 = vst [vmem:[%s1104 + $0x24] sm:$0xf] %v1094
          %1115 = vst [vmem:[%s1104 + $0x28] sm:$0xf] %v1095
          %1116 = vst [vmem:[%s1104 + $0x2c] sm:$0xf] %v1096
          %1117 = vst [vmem:[%s1104 + $0x30] sm:$0xf] %v1097
          %1118 = vst [vmem:[%s1104 + $0x34] sm:$0xf] %v1098
          %1119 = vst [vmem:[%s1104 + $0x38] sm:$0xf] %v1099
          %1120 = vst [vmem:[%s1104 + $0x3c] sm:$0xf] %v1100
        $region76: #{tpu_custom_call.1} parent=39 // pred_fallthru
          _
        %p1121 = scmp.eq.s32.totalorder %s26, 3
        %p1122 = pnand %p860, %p1121
        %p1123 = pneg %p1122
        // Predicated region
        $region77: #{tpu_custom_call.1} parent=39 // pred_check
          _
        $region78: #{tpu_custom_call.1} parent=39 // pred_check_branch
          %1125 = sbr.rel (%p1122) target = $region80
        $region79: #{tpu_custom_call.1} parent=39 // pred_region
          %v1126 = vld [vmem:[#allocation2] sm:$0xff]
          %v1127 = vld [vmem:[#allocation2 + $0x8] sm:$0xff]
          %v1128 = vld [vmem:[#allocation2 + $0x10] sm:$0xff]
          %v1129 = vld [vmem:[#allocation2 + $0x18] sm:$0xff]
          %v1130 = vld [vmem:[#allocation2 + $0x20] sm:$0xff]
          %v1131 = vld [vmem:[#allocation2 + $0x28] sm:$0xff]
          %v1132 = vld [vmem:[#allocation2 + $0x30] sm:$0xff]
          %v1133 = vld [vmem:[#allocation2 + $0x38] sm:$0xff]
          %v1134 = vld [vmem:[#allocation2 + $0x40] sm:$0xff]
          %v1135 = vld [vmem:[#allocation2 + $0x48] sm:$0xff]
          %v1136 = vld [vmem:[#allocation2 + $0x50] sm:$0xff]
          %v1137 = vld [vmem:[#allocation2 + $0x58] sm:$0xff]
          %v1138 = vld [vmem:[#allocation2 + $0x60] sm:$0xff]
          %v1139 = vld [vmem:[#allocation2 + $0x68] sm:$0xff]
          %v1140 = vld [vmem:[#allocation2 + $0x70] sm:$0xff]
          %v1141 = vld [vmem:[#allocation2 + $0x78] sm:$0xff]
          %v1142 = vld [vmem:[%s312] sm:$0x1]
          %v1144 = vperm.slane %v1142, 0
          %v1146 = vadd.f32 %v1126, %v1144
          %v1147 = vadd.f32 %v1127, %v1144
          %v1148 = vadd.f32 %v1128, %v1144
          %v1149 = vadd.f32 %v1129, %v1144
          %v1150 = vadd.f32 %v1130, %v1144
          %v1151 = vadd.f32 %v1131, %v1144
          %v1152 = vadd.f32 %v1132, %v1144
          %v1153 = vadd.f32 %v1133, %v1144
          %v1154 = vadd.f32 %v1134, %v1144
          %v1155 = vadd.f32 %v1135, %v1144
          %v1156 = vadd.f32 %v1136, %v1144
          %v1157 = vadd.f32 %v1137, %v1144
          %v1158 = vadd.f32 %v1138, %v1144
          %v1159 = vadd.f32 %v1139, %v1144
          %v1160 = vadd.f32 %v1140, %v1144
          %v1161 = vadd.f32 %v1141, %v1144
          %v1162 = vld [vmem:[%s4] sm:$0x1]
          %vm1163 = vcmp.gt.f32.partialorder %v1146, 0.0
          %vm1164 = vcmp.gt.f32.partialorder %v1147, 0.0
          %vm1165 = vcmp.gt.f32.partialorder %v1148, 0.0
          %vm1166 = vcmp.gt.f32.partialorder %v1149, 0.0
          %vm1167 = vcmp.gt.f32.partialorder %v1150, 0.0
          %vm1168 = vcmp.gt.f32.partialorder %v1151, 0.0
          %vm1169 = vcmp.gt.f32.partialorder %v1152, 0.0
          %vm1170 = vcmp.gt.f32.partialorder %v1153, 0.0
          %vm1171 = vcmp.gt.f32.partialorder %v1154, 0.0
          %vm1172 = vcmp.gt.f32.partialorder %v1155, 0.0
          %vm1173 = vcmp.gt.f32.partialorder %v1156, 0.0
          %vm1174 = vcmp.gt.f32.partialorder %v1157, 0.0
          %vm1175 = vcmp.gt.f32.partialorder %v1158, 0.0
          %vm1176 = vcmp.gt.f32.partialorder %v1159, 0.0
          %vm1177 = vcmp.gt.f32.partialorder %v1160, 0.0
          %vm1178 = vcmp.gt.f32.partialorder %v1161, 0.0
          %v1180 = vperm.slane %v1162, 0
          %v1182 = vmul.f32 %v1180, %v1146
          %v1183 = vmul.f32 %v1180, %v1147
          %v1184 = vmul.f32 %v1180, %v1148
          %v1185 = vmul.f32 %v1180, %v1149
          %v1186 = vmul.f32 %v1180, %v1150
          %v1187 = vmul.f32 %v1180, %v1151
          %v1188 = vmul.f32 %v1180, %v1152
          %v1189 = vmul.f32 %v1180, %v1153
          %v1190 = vmul.f32 %v1180, %v1154
          %v1191 = vmul.f32 %v1180, %v1155
          %v1192 = vmul.f32 %v1180, %v1156
          %v1193 = vmul.f32 %v1180, %v1157
          %v1194 = vmul.f32 %v1180, %v1158
          %v1195 = vmul.f32 %v1180, %v1159
          %v1196 = vmul.f32 %v1180, %v1160
          %v1197 = vmul.f32 %v1180, %v1161
          %v1198 = vsel %vm1163, %v1146, %v1182
          %v1199 = vsel %vm1164, %v1147, %v1183
          %v1200 = vsel %vm1165, %v1148, %v1184
          %v1201 = vsel %vm1166, %v1149, %v1185
          %v1202 = vsel %vm1167, %v1150, %v1186
          %v1203 = vsel %vm1168, %v1151, %v1187
          %v1204 = vsel %vm1169, %v1152, %v1188
          %v1205 = vsel %vm1170, %v1153, %v1189
          %v1206 = vsel %vm1171, %v1154, %v1190
          %v1207 = vsel %vm1172, %v1155, %v1191
          %v1208 = vsel %vm1173, %v1156, %v1192
          %v1209 = vsel %vm1174, %v1157, %v1193
          %v1210 = vsel %vm1175, %v1158, %v1194
          %v1211 = vsel %vm1176, %v1159, %v1195
          %v1212 = vsel %vm1177, %v1160, %v1196
          %v1213 = vsel %vm1178, %v1161, %v1197
          %s1214 = scalar_lea.vmem [#allocation12], %s346
          %1215 = vst [vmem:[%s1214] sm:$0xff] %v1198
          %1216 = vst [vmem:[%s1214 + $0x8] sm:$0xff] %v1199
          %1217 = vst [vmem:[%s1214 + $0x10] sm:$0xff] %v1200
          %1218 = vst [vmem:[%s1214 + $0x18] sm:$0xff] %v1201
          %1219 = vst [vmem:[%s1214 + $0x20] sm:$0xff] %v1202
          %1220 = vst [vmem:[%s1214 + $0x28] sm:$0xff] %v1203
          %1221 = vst [vmem:[%s1214 + $0x30] sm:$0xff] %v1204
          %1222 = vst [vmem:[%s1214 + $0x38] sm:$0xff] %v1205
          %1223 = vst [vmem:[%s1214 + $0x40] sm:$0xff] %v1206
          %1224 = vst [vmem:[%s1214 + $0x48] sm:$0xff] %v1207
          %1225 = vst [vmem:[%s1214 + $0x50] sm:$0xff] %v1208
          %1226 = vst [vmem:[%s1214 + $0x58] sm:$0xff] %v1209
          %1227 = vst [vmem:[%s1214 + $0x60] sm:$0xff] %v1210
          %1228 = vst [vmem:[%s1214 + $0x68] sm:$0xff] %v1211
          %1229 = vst [vmem:[%s1214 + $0x70] sm:$0xff] %v1212
          %1230 = vst [vmem:[%s1214 + $0x78] sm:$0xff] %v1213
        $region80: #{tpu_custom_call.1} parent=39 // pred_fallthru
          _
        // Predicated region
        $region81: #{tpu_custom_call.1} parent=39 // pred_check
          %p1231 = pneg %p175
        $region82: #{tpu_custom_call.1} parent=39 // pred_check_branch
          %1233 = sbr.rel (%p1231) target = $region84
        $region83: #{tpu_custom_call.1} parent=39 // pred_region
          %1235 = vsyncadd [#allocation7], 0
          %s1236 = sshll.u32 [#allocation12], 4
          %s1237 = int_to_ptr.vmem [resolvable:$true] %s1236
          %s1238 = sshll.u32 %s5, 4
          %s1239 = int_to_ptr.hbm [resolvable:$true] %s1238
          %1244 = dma.vmem_to_hbm [thread:$0]  %s1237, 4096, %s1239, [#allocation7], 128, 128, 8
        $region84: #{tpu_custom_call.1} parent=39 // pred_fallthru
          _
        // Predicated region
        $region85: #{tpu_custom_call.1} parent=39 // pred_check
          %p1245 = pneg %p175
        $region86: #{tpu_custom_call.1} parent=39 // pred_check_branch
          %1247 = sbr.rel (%p1245) target = $region88
        $region87: #{tpu_custom_call.1} parent=39 // pred_region
          %1249 = dma.done [#allocation7], 4096
        $region88: #{tpu_custom_call.1} parent=39 // pred_fallthru
          _
      $region40: #{tpu_custom_call.1} parent=5 // pred_fallthru
        _
      %p1250 = scmp.le.s32.totalorder 2, %s16
      // Predicated region
      $region89: #{tpu_custom_call.1} parent=5 // pred_check
        %p1251 = pneg %p1250
      $region90: #{tpu_custom_call.1} parent=5 // pred_check_branch
        %1253 = sbr.rel (%p1251) target = $region92
      $region91: #{tpu_custom_call.1} parent=5 // pred_region
        %s1254 = ssub.s32 %s16, 2
      $region92: #{tpu_custom_call.1} parent=5 // pred_fallthru
        _
    $region6: #{tpu_custom_call.1} parent=1 // loop_footer
      %s20 = sadd.s32 1, %s16
    $region7: #{tpu_custom_call.1} parent=1 // loop_footer_branch
      %15 = sbr.rel target = $region3
    $region8: #{tpu_custom_call.1} parent=1 // loop_exit
      _
    %1255 = vsyncpa [#allocation6], 1
    %s1256 = scalar_lea.sflag [#allocation6], 1
    %1257 = vsyncpa %s1256, 1
    %1258 = vsyncpa [#allocation9], 1
    %1259 = vsyncpa [#allocation7], 1
    %s1260 = scalar_lea.sflag [#allocation7], 1
    %1261 = vsyncpa %s1260, 1

</llo_original>
